<compile_context>
chip_gen: v7x
topology: tpu7x:2x2x1
jax: 0.10.0
libtpu: 0.0.40
codegen_flags: <defaults>
</compile_context>

<pallas_src>
import functools
import math

import jax
import jax.numpy as jnp
from jax import lax
from jax.experimental import pallas as pl
from jax.experimental.pallas import tpu as pltpu


def _layer_norm(y, gamma, beta, eps=1e-5):
    mu = jnp.mean(y, axis=-1, keepdims=True)
    var = jnp.mean((y - mu) ** 2, axis=-1, keepdims=True)
    return (y - mu) * lax.rsqrt(var + eps) * gamma + beta


def encoder_layer_kernel(
    x_ref, mask_ref,
    wq_ref, bq_ref, wkv_ref, bkv_ref,     # (D,D),(1,D),(D,2D),(1,2D)
    wo_ref, bo_ref,                       # (D,D),(1,D)
    g1_ref, be1_ref, g2_ref, be2_ref,     # (1,D) each
    w1_ref, b1_ref, w2_ref, b2_ref,       # (D,Dff),(1,Dff),(Dff,D),(1,D)
    o_ref,
    kv_scr, attn_scr,                     # VMEM scratch: (S,2D), (tq,D)
    *, heads, q_tile,
):
    qi = pl.program_id(1)
    cd = x_ref.dtype                      # compute dtype for MXU operands
    D = x_ref.shape[-1]
    dh = D // heads
    scale = 1.0 / math.sqrt(dh)

    # ---- K/V projection: once per batch row, persisted across query tiles ----
    @pl.when(qi == 0)
    def _():
        x_full = x_ref[0]                                             # (S, D)
        kv = (jnp.dot(x_full, wkv_ref[...],
                      preferred_element_type=jnp.float32) + bkv_ref[...])
        kv_scr[...] = kv.astype(cd)                                   # (S, 2D)

    # query rows for this tile, sliced from the already-resident full block
    row0 = pl.multiple_of(qi * q_tile, q_tile)
    xq = x_ref[0, pl.ds(row0, q_tile), :]                             # (tq, D)
    mask = mask_ref[0]                                                # (tq, S)
    neg = jnp.where(mask > 0, 0.0, -1e9).astype(jnp.float32)

    q = (jnp.dot(xq, wq_ref[...], preferred_element_type=jnp.float32)
         + bq_ref[...]).astype(cd)                                    # (tq, D)
    k = kv_scr[:, :D]                                                 # (S, D)
    v = kv_scr[:, D:]                                                 # (S, D)

    # ---- per-head scaled-dot-product attention ------------------------------
    for h in range(heads):
        qh = q[:, h * dh:(h + 1) * dh]                                # (tq, dh)
        kh = k[:, h * dh:(h + 1) * dh]                                # (S,  dh)
        vh = v[:, h * dh:(h + 1) * dh]                                # (S,  dh)
        # contraction on last dims of both operands -> no kh.T relayout
        s = lax.dot_general(qh, kh, (((1,), (1,)), ((), ())),
                            preferred_element_type=jnp.float32) * scale + neg
        s = s - jnp.max(s, axis=-1, keepdims=True)
        p = jnp.exp(s)
        p = p * pl.reciprocal(jnp.sum(p, axis=-1, keepdims=True), approx=True)
        ho = jnp.dot(p.astype(cd), vh, preferred_element_type=jnp.float32)
        attn_scr[:, h * dh:(h + 1) * dh] = ho.astype(cd)              # no concat

    # concat-heads output projection: one (tq,D)@(D,D) matmul
    attn_out = (jnp.dot(attn_scr[...], wo_ref[...],
                        preferred_element_type=jnp.float32) + bo_ref[...])

    # ---- Add & Norm 1  (dropout == identity in eval mode) -------------------
    x1 = _layer_norm(xq.astype(jnp.float32) + attn_out, g1_ref[...], be1_ref[...])

    # ---- position-wise FFN ---------------------------------------------------
    h1 = (jnp.dot(x1.astype(cd), w1_ref[...],
                  preferred_element_type=jnp.float32) + b1_ref[...])
    h1 = jnp.maximum(h1, 0.0)
    ffn = (jnp.dot(h1.astype(cd), w2_ref[...],
                   preferred_element_type=jnp.float32) + b2_ref[...])

    # ---- Add & Norm 2 --------------------------------------------------------
    out = _layer_norm(x1 + ffn, g2_ref[...], be2_ref[...])
    o_ref[0] = out.astype(o_ref.dtype)


def _pick_q_tile(S, q_tile):
    """Largest multiple-of-8 tile <= q_tile that divides S (or S itself)."""
    if S <= q_tile:
        return S
    t = (min(q_tile, S) // 8) * 8
    while t >= 8:
        if S % t == 0:
            return t
        t -= 8
    return S   # no aligned divisor: process the whole sequence in one tile


def _single_buffered_spec(shape, index_map):
    # Blocks whose index never changes along qi: single pipeline buffer so they
    # are not double-buffered in VMEM (matters on v7x's 64 MiB VMEM).
    try:
        return pl.BlockSpec(shape, index_map, pipeline_mode=pl.Buffered(1))
    except Exception:   # older JAX without pipeline_mode — fall back silently
        return pl.BlockSpec(shape, index_map)


def encoder_layer(x, mask, params, *, q_tile=256, compute_dtype=None):
    B, S, D = x.shape
    H = params["heads"]
    Dff = params["w1"].shape[1]
    out_dtype = x.dtype

    tq = _pick_q_tile(S, q_tile)
    n_qt = S // tq                         # tq divides S by construction

    cd = jnp.dtype(compute_dtype) if compute_dtype is not None else x.dtype
    xk = x.astype(cd)
    mask = mask.astype(jnp.float32)

    # Fuse K and V projection weights into one (D, 2D) matmul operand.
    wq = params["wq"].astype(cd)
    wo = params["wo"].astype(cd)
    w1 = params["w1"].astype(cd)
    w2 = params["w2"].astype(cd)
    wkv = jnp.concatenate([params["wk"], params["wv"]], axis=1).astype(cd)
    bkv = jnp.concatenate([params["bk"], params["bv"]], axis=1)

    def zeros_map(n):
        return lambda b, qi: (0,) * n

    def const_spec(shape):
        return _single_buffered_spec(shape, zeros_map(len(shape)))

    in_specs = [
        _single_buffered_spec((1, S, D), lambda b, qi: (b, 0, 0)),    # x (full seq)
        pl.BlockSpec((1, tq, S), lambda b, qi: (b, qi, 0)),           # mask tile
        const_spec((D, D)), const_spec((1, D)),                       # wq, bq
        const_spec((D, 2 * D)), const_spec((1, 2 * D)),               # wkv, bkv
        const_spec((D, D)), const_spec((1, D)),                       # wo, bo
        const_spec((1, D)), const_spec((1, D)),                       # gamma1, beta1
        const_spec((1, D)), const_spec((1, D)),                       # gamma2, beta2
        const_spec((D, Dff)), const_spec((1, Dff)),                   # w1, b1
        const_spec((Dff, D)), const_spec((1, D)),                     # w2, b2
    ]

    operands = (
        xk, mask,
        wq, params["bq"], wkv, bkv, wo, params["bo"],
        params["gamma1"], params["beta1"], params["gamma2"], params["beta2"],
        w1, params["b1"], w2, params["b2"],
    )

    # ---- VMEM budget: single-buffered constants + pipelined blocks +
    #      live f32 intermediates, clamped below this chip's physical VMEM.
    consts = operands[2:]
    const_bytes = sum(int(c.size) * c.dtype.itemsize for c in consts)
    itm = jnp.dtype(cd).itemsize
    block_bytes = (S * D * itm                     # x block (single-buffered)
                   + 2 * tq * S * 4                # mask block (double-buffered)
                   + 2 * tq * D * itm)             # out block (double-buffered)
    scratch_bytes = (S * 2 * D + tq * D) * itm
    interm_bytes = 4 * (3 * tq * S + tq * Dff + 6 * tq * D + S * 2 * D)
    try:
        vmem_cap = int(pltpu.get_tpu_info().vmem_capacity_bytes)
    except Exception:
        vmem_cap = 64 * 2 ** 20                    # conservative (v7x per-core)
    vmem_limit = const_bytes + block_bytes + scratch_bytes + interm_bytes + (4 << 20)
    vmem_limit = int(max(16 << 20, min(vmem_limit, vmem_cap - (4 << 20))))

    kernel = functools.partial(encoder_layer_kernel, heads=H, q_tile=tq)
    return pl.pallas_call(
        kernel,
        out_shape=jax.ShapeDtypeStruct((B, S, D), out_dtype),
        grid=(B, n_qt),
        in_specs=in_specs,
        out_specs=pl.BlockSpec((1, tq, D), lambda b, qi: (b, qi, 0)),
        scratch_shapes=[pltpu.VMEM((S, 2 * D), cd),   # persistent K|V (this batch row)
                        pltpu.VMEM((tq, D), cd)],     # concat-heads attention output
        compiler_params=pltpu.CompilerParams(
            # batch axis parallel (megacore); query-tile axis must be
            # sequential ("arbitrary") so the qi==0 K/V projection is reused.
            dimension_semantics=("parallel", "arbitrary"),
            vmem_limit_bytes=vmem_limit),
    )(*operands)


def init_params(key, d_model, heads, forward_expansion):
    dff = d_model * forward_expansion
    keys = jax.random.split(key, 12)
    s = 0.02
    # Weights stored in "x @ W" layout; heads are contiguous dh-wide column blocks.
    wq = s * jax.random.normal(keys[0], (d_model, d_model), jnp.float32)
    wk = s * jax.random.normal(keys[1], (d_model, d_model), jnp.float32)
    wv = s * jax.random.normal(keys[2], (d_model, d_model), jnp.float32)
    wo = s * jax.random.normal(keys[3], (d_model, d_model), jnp.float32)
    bq = s * jax.random.normal(keys[4], (1, d_model), jnp.float32)
    bk = s * jax.random.normal(keys[5], (1, d_model), jnp.float32)
    bv = s * jax.random.normal(keys[6], (1, d_model), jnp.float32)
    bo = s * jax.random.normal(keys[7], (1, d_model), jnp.float32)
    w1 = s * jax.random.normal(keys[8], (d_model, dff), jnp.float32)
    b1 = s * jax.random.normal(keys[9], (1, dff), jnp.float32)
    w2 = s * jax.random.normal(keys[10], (dff, d_model), jnp.float32)
    b2 = s * jax.random.normal(keys[11], (1, d_model), jnp.float32)
    return dict(
        heads=heads,
        wq=wq, bq=bq, wk=wk, bk=bk, wv=wv, bv=bv, wo=wo, bo=bo,
        gamma1=jnp.ones((1, d_model), jnp.float32),
        beta1=jnp.zeros((1, d_model), jnp.float32),
        gamma2=jnp.ones((1, d_model), jnp.float32),
        beta2=jnp.zeros((1, d_model), jnp.float32),
        w1=w1, b1=b1, w2=w2, b2=b2,
    )


def encoder_layer_ref(x, mask, params):
    """Pure-JAX reference (mirrors the PyTorch module in eval mode)."""
    B, S, D = x.shape
    H = params["heads"]
    dh = D // H
    q = x @ params["wq"] + params["bq"]
    k = x @ params["wk"] + params["bk"]
    v = x @ params["wv"] + params["bv"]

    def split(t):
        return t.reshape(B, S, H, dh).transpose(0, 2, 1, 3)          # (B,H,S,dh)

    qh, kh, vh = split(q), split(k), split(v)
    s = jnp.einsum("bhqd,bhkd->bhqk", qh, kh) / math.sqrt(dh)
    s = s + jnp.where(mask[:, None, :, :] > 0, 0.0, -1e9)
    p = jax.nn.softmax(s, axis=-1)
    o = jnp.einsum("bhqk,bhkd->bhqd", p, vh)
    o = o.transpose(0, 2, 1, 3).reshape(B, S, D)
    attn = o @ params["wo"] + params["bo"]
    x1 = _layer_norm(x + attn, params["gamma1"], params["beta1"])
    h1 = jax.nn.relu(x1 @ params["w1"] + params["b1"])
    ffn = h1 @ params["w2"] + params["b2"]
    return _layer_norm(x1 + ffn, params["gamma2"], params["beta2"])


if __name__ == "__main__":
    B, S, D, H = 2, 8, 32, 4
    key = jax.random.PRNGKey(0)
    kx, kp = jax.random.split(key)

    x = jax.random.normal(kx, (B, S, D), jnp.float32)

    # padding-style mask: batch 0 attends all 8 positions, batch 1 only first 6
    lengths = jnp.array([8, 6], dtype=jnp.int32)
    col = jnp.arange(S)[None, None, :]
    mask = (col < lengths[:, None, None]).astype(jnp.float32)
    mask = jnp.broadcast_to(mask, (B, S, S))

    params = init_params(kp, D, H, forward_expansion=4)

    out = encoder_layer(x, mask, params)
    jax.block_until_ready(out)
    assert out.shape == (B, S, D)

    ref = encoder_layer_ref(x, mask, params)
    max_err = float(jnp.max(jnp.abs(out - ref)))
    assert max_err < 2e-2, f"mismatch vs reference: {max_err}"

    print("KERNEL_OK")
</pallas_src>

<mosaic_0001>
module attributes {stable_mosaic.version = 11 : i64} {
  func.func @encoder_layer_kernel(%arg0: i32, %arg1: i32, %arg2: memref<1x8x32xf32, #tpu.memory_space<vmem>>, %arg3: memref<1x8x8xf32, #tpu.memory_space<vmem>>, %arg4: memref<32x32xf32, #tpu.memory_space<vmem>>, %arg5: memref<1x32xf32, #tpu.memory_space<vmem>>, %arg6: memref<32x64xf32, #tpu.memory_space<vmem>>, %arg7: memref<1x64xf32, #tpu.memory_space<vmem>>, %arg8: memref<32x32xf32, #tpu.memory_space<vmem>>, %arg9: memref<1x32xf32, #tpu.memory_space<vmem>>, %arg10: memref<1x32xf32, #tpu.memory_space<vmem>>, %arg11: memref<1x32xf32, #tpu.memory_space<vmem>>, %arg12: memref<1x32xf32, #tpu.memory_space<vmem>>, %arg13: memref<1x32xf32, #tpu.memory_space<vmem>>, %arg14: memref<32x128xf32, #tpu.memory_space<vmem>>, %arg15: memref<1x128xf32, #tpu.memory_space<vmem>>, %arg16: memref<128x32xf32, #tpu.memory_space<vmem>>, %arg17: memref<1x32xf32, #tpu.memory_space<vmem>>, %arg18: memref<1x8x32xf32, #tpu.memory_space<vmem>>, %arg19: memref<8x64xf32, #tpu.memory_space<vmem>>, %arg20: memref<8x32xf32, #tpu.memory_space<vmem>>) attributes {dimension_semantics = [#tpu.dimension_semantics<parallel>, #tpu.dimension_semantics<arbitrary>], iteration_bounds = array<i64: 2, 1>, scalar_prefetch = 0 : i64, scratch_operands = 2 : i64, tpu.core_type = #tpu.core_type<tc>, window_params = [{pipeline_mode = #tpu.pipeline_mode<synchronous>, transform_indices = @transform_0, window_bounds = array<i64: 1, 8, 32>}, {transform_indices = @transform_1, window_bounds = array<i64: 1, 8, 8>}, {pipeline_mode = #tpu.pipeline_mode<synchronous>, transform_indices = @transform_2, window_bounds = array<i64: 32, 32>}, {pipeline_mode = #tpu.pipeline_mode<synchronous>, transform_indices = @transform_3, window_bounds = array<i64: 1, 32>}, {pipeline_mode = #tpu.pipeline_mode<synchronous>, transform_indices = @transform_4, window_bounds = array<i64: 32, 64>}, {pipeline_mode = #tpu.pipeline_mode<synchronous>, transform_indices = @transform_5, window_bounds = array<i64: 1, 64>}, {pipeline_mode = #tpu.pipeline_mode<synchronous>, transform_indices = @transform_6, window_bounds = array<i64: 32, 32>}, {pipeline_mode = #tpu.pipeline_mode<synchronous>, transform_indices = @transform_7, window_bounds = array<i64: 1, 32>}, {pipeline_mode = #tpu.pipeline_mode<synchronous>, transform_indices = @transform_8, window_bounds = array<i64: 1, 32>}, {pipeline_mode = #tpu.pipeline_mode<synchronous>, transform_indices = @transform_9, window_bounds = array<i64: 1, 32>}, {pipeline_mode = #tpu.pipeline_mode<synchronous>, transform_indices = @transform_10, window_bounds = array<i64: 1, 32>}, {pipeline_mode = #tpu.pipeline_mode<synchronous>, transform_indices = @transform_11, window_bounds = array<i64: 1, 32>}, {pipeline_mode = #tpu.pipeline_mode<synchronous>, transform_indices = @transform_12, window_bounds = array<i64: 32, 128>}, {pipeline_mode = #tpu.pipeline_mode<synchronous>, transform_indices = @transform_13, window_bounds = array<i64: 1, 128>}, {pipeline_mode = #tpu.pipeline_mode<synchronous>, transform_indices = @transform_14, window_bounds = array<i64: 128, 32>}, {pipeline_mode = #tpu.pipeline_mode<synchronous>, transform_indices = @transform_15, window_bounds = array<i64: 1, 32>}, {transform_indices = @transform_16, window_bounds = array<i64: 1, 8, 32>}]} {
    %c0_i32 = arith.constant 0 : i32
    %0 = arith.cmpi eq, %arg1, %c0_i32 : i32
    %1 = arith.extui %0 : i1 to i32
    %c0_i32_0 = arith.constant 0 : i32
    %2 = arith.cmpi ne, %1, %c0_i32_0 : i32
    scf.if %2 {
      %c0_79 = arith.constant 0 : index
      %c0_80 = arith.constant 0 : index
      %c0_81 = arith.constant 0 : index
      %169 = vector.load %arg2[%c0_79, %c0_80, %c0_81] : memref<1x8x32xf32, #tpu.memory_space<vmem>>, vector<1x8x32xf32>
      %170 = vector.shape_cast %169 : vector<1x8x32xf32> to vector<8x32xf32>
      %c0_82 = arith.constant 0 : index
      %c0_83 = arith.constant 0 : index
      %171 = vector.load %arg6[%c0_82, %c0_83] : memref<32x64xf32, #tpu.memory_space<vmem>>, vector<32x64xf32>
      %cst_84 = arith.constant dense<0.000000e+00> : vector<8x64xf32>
      %172 = tpu.matmul %170, %171, %cst_84 {dimension_numbers = #tpu.dot_dimension_numbers<[1], [0], [0], [1], [0, 0, 1, 1], [], []>} : vector<8x32xf32>, vector<32x64xf32>, vector<8x64xf32> -> vector<8x64xf32>
      %c0_85 = arith.constant 0 : index
      %c0_86 = arith.constant 0 : index
      %173 = vector.load %arg7[%c0_85, %c0_86] : memref<1x64xf32, #tpu.memory_space<vmem>>, vector<1x64xf32>
      %174 = vector.broadcast %173 : vector<1x64xf32> to vector<8x64xf32>
      %175 = arith.addf %172, %174 : vector<8x64xf32>
      %c0_87 = arith.constant 0 : index
      %c0_88 = arith.constant 0 : index
      %176 = vector.load %arg19[%c0_87, %c0_88] : memref<8x64xf32, #tpu.memory_space<vmem>>, vector<8x64xf32>
      tpu.vector_store %arg19[%c0_87, %c0_88], %175 {strides = array<i32>} : memref<8x64xf32, #tpu.memory_space<vmem>>, vector<8x64xf32>,
    } else {
    }
    %c8_i32 = arith.constant 8 : i32
    %3 = arith.muli %arg1, %c8_i32 : i32
    %4 = tpu.assume_multiple %3, 8 : i32
    %c0 = arith.constant 0 : index
    %5 = arith.index_cast %4 : i32 to index
    %c0_1 = arith.constant 0 : index
    %6 = vector.load %arg2[%c0, %5, %c0_1] : memref<1x8x32xf32, #tpu.memory_space<vmem>>, vector<1x8x32xf32>
    %7 = vector.shape_cast %6 : vector<1x8x32xf32> to vector<8x32xf32>
    %c0_2 = arith.constant 0 : index
    %c0_3 = arith.constant 0 : index
    %c0_4 = arith.constant 0 : index
    %8 = vector.load %arg3[%c0_2, %c0_3, %c0_4] : memref<1x8x8xf32, #tpu.memory_space<vmem>>, vector<1x8x8xf32>
    %9 = vector.shape_cast %8 : vector<1x8x8xf32> to vector<8x8xf32>
    %cst = arith.constant 0.000000e+00 : f32
    %10 = vector.broadcast %cst : f32 to vector<8x8xf32>
    %11 = arith.cmpf ogt, %9, %10 : vector<8x8xf32>
    %cst_5 = arith.constant 0.000000e+00 : f32
    %cst_6 = arith.constant -1.000000e+09 : f32
    %12 = vector.broadcast %cst_5 : f32 to vector<8x8xf32>
    %13 = vector.broadcast %cst_6 : f32 to vector<8x8xf32>
    %14 = arith.select %11, %12, %13 : vector<8x8xi1>, vector<8x8xf32>
    %c0_7 = arith.constant 0 : index
    %c0_8 = arith.constant 0 : index
    %15 = vector.load %arg4[%c0_7, %c0_8] : memref<32x32xf32, #tpu.memory_space<vmem>>, vector<32x32xf32>
    %cst_9 = arith.constant dense<0.000000e+00> : vector<8x32xf32>
    %16 = tpu.matmul %7, %15, %cst_9 {dimension_numbers = #tpu.dot_dimension_numbers<[1], [0], [0], [1], [0, 0, 1, 1], [], []>} : vector<8x32xf32>, vector<32x32xf32>, vector<8x32xf32> -> vector<8x32xf32>
    %c0_10 = arith.constant 0 : index
    %c0_11 = arith.constant 0 : index
    %17 = vector.load %arg5[%c0_10, %c0_11] : memref<1x32xf32, #tpu.memory_space<vmem>>, vector<1x32xf32>
    %18 = vector.broadcast %17 : vector<1x32xf32> to vector<8x32xf32>
    %19 = arith.addf %16, %18 : vector<8x32xf32>
    %c0_12 = arith.constant 0 : index
    %c0_13 = arith.constant 0 : index
    %20 = vector.load %arg19[%c0_12, %c0_13] : memref<8x64xf32, #tpu.memory_space<vmem>>, vector<8x32xf32>
    %c0_14 = arith.constant 0 : index
    %c32 = arith.constant 32 : index
    %21 = vector.load %arg19[%c0_14, %c32] : memref<8x64xf32, #tpu.memory_space<vmem>>, vector<8x32xf32>
    %22 = vector.extract_strided_slice %19 {offsets = [0, 0], sizes = [8, 8], strides = [1, 1]} : vector<8x32xf32> to vector<8x8xf32>
    %23 = vector.extract_strided_slice %20 {offsets = [0, 0], sizes = [8, 8], strides = [1, 1]} : vector<8x32xf32> to vector<8x8xf32>
    %24 = vector.extract_strided_slice %21 {offsets = [0, 0], sizes = [8, 8], strides = [1, 1]} : vector<8x32xf32> to vector<8x8xf32>
    %cst_15 = arith.constant dense<0.000000e+00> : vector<8x8xf32>
    %25 = tpu.matmul %22, %23, %cst_15 {dimension_numbers = #tpu.dot_dimension_numbers<[1], [1], [0], [0], [0, 0, 1, 0], [], []>} : vector<8x8xf32>, vector<8x8xf32>, vector<8x8xf32> -> vector<8x8xf32>
    %cst_16 = arith.constant 0.353553385 : f32
    %26 = vector.broadcast %cst_16 : f32 to vector<8x8xf32>
    %27 = arith.mulf %25, %26 : vector<8x8xf32>
    %28 = arith.addf %27, %14 : vector<8x8xf32>
    %cst_17 = arith.constant dense<0xFF800000> : vector<8xf32>
    %29 = vector.multi_reduction <maximumf>, %28, %cst_17 [1] : vector<8x8xf32> to vector<8xf32>
    %30 = vector.shape_cast %29 : vector<8xf32> to vector<8x1xf32>
    %31 = vector.broadcast %30 : vector<8x1xf32> to vector<8x8xf32>
    %32 = arith.subf %28, %31 : vector<8x8xf32>
    %33 = math.exp %32 : vector<8x8xf32>
    %cst_18 = arith.constant dense<0.000000e+00> : vector<8xf32>
    %34 = vector.multi_reduction <add>, %33, %cst_18 [1] : vector<8x8xf32> to vector<8xf32>
    %35 = vector.shape_cast %34 : vector<8xf32> to vector<8x1xf32>
    %36 = tpu.reciprocal %35 {approx = true} : vector<8x1xf32> -> vector<8x1xf32>
    %37 = vector.broadcast %36 : vector<8x1xf32> to vector<8x8xf32>
    %38 = arith.mulf %33, %37 : vector<8x8xf32>
    %cst_19 = arith.constant dense<0.000000e+00> : vector<8x8xf32>
    %39 = tpu.matmul %38, %24, %cst_19 {dimension_numbers = #tpu.dot_dimension_numbers<[1], [0], [0], [1], [0, 0, 1, 1], [], []>} : vector<8x8xf32>, vector<8x8xf32>, vector<8x8xf32> -> vector<8x8xf32>
    %c0_20 = arith.constant 0 : index
    %c0_21 = arith.constant 0 : index
    %40 = vector.load %arg20[%c0_20, %c0_21] : memref<8x32xf32, #tpu.memory_space<vmem>>, vector<8x8xf32>
    tpu.vector_store %arg20[%c0_20, %c0_21], %39 {strides = array<i32>} : memref<8x32xf32, #tpu.memory_space<vmem>>, vector<8x8xf32>,
    %41 = vector.extract_strided_slice %19 {offsets = [0, 8], sizes = [8, 8], strides = [1, 1]} : vector<8x32xf32> to vector<8x8xf32>
    %42 = vector.extract_strided_slice %20 {offsets = [0, 8], sizes = [8, 8], strides = [1, 1]} : vector<8x32xf32> to vector<8x8xf32>
    %43 = vector.extract_strided_slice %21 {offsets = [0, 8], sizes = [8, 8], strides = [1, 1]} : vector<8x32xf32> to vector<8x8xf32>
    %cst_22 = arith.constant dense<0.000000e+00> : vector<8x8xf32>
    %44 = tpu.matmul %41, %42, %cst_22 {dimension_numbers = #tpu.dot_dimension_numbers<[1], [1], [0], [0], [0, 0, 1, 0], [], []>} : vector<8x8xf32>, vector<8x8xf32>, vector<8x8xf32> -> vector<8x8xf32>
    %cst_23 = arith.constant 0.353553385 : f32
    %45 = vector.broadcast %cst_23 : f32 to vector<8x8xf32>
    %46 = arith.mulf %44, %45 : vector<8x8xf32>
    %47 = arith.addf %46, %14 : vector<8x8xf32>
    %cst_24 = arith.constant dense<0xFF800000> : vector<8xf32>
    %48 = vector.multi_reduction <maximumf>, %47, %cst_24 [1] : vector<8x8xf32> to vector<8xf32>
    %49 = vector.shape_cast %48 : vector<8xf32> to vector<8x1xf32>
    %50 = vector.broadcast %49 : vector<8x1xf32> to vector<8x8xf32>
    %51 = arith.subf %47, %50 : vector<8x8xf32>
    %52 = math.exp %51 : vector<8x8xf32>
    %cst_25 = arith.constant dense<0.000000e+00> : vector<8xf32>
    %53 = vector.multi_reduction <add>, %52, %cst_25 [1] : vector<8x8xf32> to vector<8xf32>
    %54 = vector.shape_cast %53 : vector<8xf32> to vector<8x1xf32>
    %55 = tpu.reciprocal %54 {approx = true} : vector<8x1xf32> -> vector<8x1xf32>
    %56 = vector.broadcast %55 : vector<8x1xf32> to vector<8x8xf32>
    %57 = arith.mulf %52, %56 : vector<8x8xf32>
    %cst_26 = arith.constant dense<0.000000e+00> : vector<8x8xf32>
    %58 = tpu.matmul %57, %43, %cst_26 {dimension_numbers = #tpu.dot_dimension_numbers<[1], [0], [0], [1], [0, 0, 1, 1], [], []>} : vector<8x8xf32>, vector<8x8xf32>, vector<8x8xf32> -> vector<8x8xf32>
    %c0_27 = arith.constant 0 : index
    %c8 = arith.constant 8 : index
    %59 = vector.load %arg20[%c0_27, %c8] : memref<8x32xf32, #tpu.memory_space<vmem>>, vector<8x8xf32>
    tpu.vector_store %arg20[%c0_27, %c8], %58 {strides = array<i32>} : memref<8x32xf32, #tpu.memory_space<vmem>>, vector<8x8xf32>,
    %60 = vector.extract_strided_slice %19 {offsets = [0, 16], sizes = [8, 8], strides = [1, 1]} : vector<8x32xf32> to vector<8x8xf32>
    %61 = vector.extract_strided_slice %20 {offsets = [0, 16], sizes = [8, 8], strides = [1, 1]} : vector<8x32xf32> to vector<8x8xf32>
    %62 = vector.extract_strided_slice %21 {offsets = [0, 16], sizes = [8, 8], strides = [1, 1]} : vector<8x32xf32> to vector<8x8xf32>
    %cst_28 = arith.constant dense<0.000000e+00> : vector<8x8xf32>
    %63 = tpu.matmul %60, %61, %cst_28 {dimension_numbers = #tpu.dot_dimension_numbers<[1], [1], [0], [0], [0, 0, 1, 0], [], []>} : vector<8x8xf32>, vector<8x8xf32>, vector<8x8xf32> -> vector<8x8xf32>
    %cst_29 = arith.constant 0.353553385 : f32
    %64 = vector.broadcast %cst_29 : f32 to vector<8x8xf32>
    %65 = arith.mulf %63, %64 : vector<8x8xf32>
    %66 = arith.addf %65, %14 : vector<8x8xf32>
    %cst_30 = arith.constant dense<0xFF800000> : vector<8xf32>
    %67 = vector.multi_reduction <maximumf>, %66, %cst_30 [1] : vector<8x8xf32> to vector<8xf32>
    %68 = vector.shape_cast %67 : vector<8xf32> to vector<8x1xf32>
    %69 = vector.broadcast %68 : vector<8x1xf32> to vector<8x8xf32>
    %70 = arith.subf %66, %69 : vector<8x8xf32>
    %71 = math.exp %70 : vector<8x8xf32>
    %cst_31 = arith.constant dense<0.000000e+00> : vector<8xf32>
    %72 = vector.multi_reduction <add>, %71, %cst_31 [1] : vector<8x8xf32> to vector<8xf32>
    %73 = vector.shape_cast %72 : vector<8xf32> to vector<8x1xf32>
    %74 = tpu.reciprocal %73 {approx = true} : vector<8x1xf32> -> vector<8x1xf32>
    %75 = vector.broadcast %74 : vector<8x1xf32> to vector<8x8xf32>
    %76 = arith.mulf %71, %75 : vector<8x8xf32>
    %cst_32 = arith.constant dense<0.000000e+00> : vector<8x8xf32>
    %77 = tpu.matmul %76, %62, %cst_32 {dimension_numbers = #tpu.dot_dimension_numbers<[1], [0], [0], [1], [0, 0, 1, 1], [], []>} : vector<8x8xf32>, vector<8x8xf32>, vector<8x8xf32> -> vector<8x8xf32>
    %c0_33 = arith.constant 0 : index
    %c16 = arith.constant 16 : index
    %78 = vector.load %arg20[%c0_33, %c16] : memref<8x32xf32, #tpu.memory_space<vmem>>, vector<8x8xf32>
    tpu.vector_store %arg20[%c0_33, %c16], %77 {strides = array<i32>} : memref<8x32xf32, #tpu.memory_space<vmem>>, vector<8x8xf32>,
    %79 = vector.extract_strided_slice %19 {offsets = [0, 24], sizes = [8, 8], strides = [1, 1]} : vector<8x32xf32> to vector<8x8xf32>
    %80 = vector.extract_strided_slice %20 {offsets = [0, 24], sizes = [8, 8], strides = [1, 1]} : vector<8x32xf32> to vector<8x8xf32>
    %81 = vector.extract_strided_slice %21 {offsets = [0, 24], sizes = [8, 8], strides = [1, 1]} : vector<8x32xf32> to vector<8x8xf32>
    %cst_34 = arith.constant dense<0.000000e+00> : vector<8x8xf32>
    %82 = tpu.matmul %79, %80, %cst_34 {dimension_numbers = #tpu.dot_dimension_numbers<[1], [1], [0], [0], [0, 0, 1, 0], [], []>} : vector<8x8xf32>, vector<8x8xf32>, vector<8x8xf32> -> vector<8x8xf32>
    %cst_35 = arith.constant 0.353553385 : f32
    %83 = vector.broadcast %cst_35 : f32 to vector<8x8xf32>
    %84 = arith.mulf %82, %83 : vector<8x8xf32>
    %85 = arith.addf %84, %14 : vector<8x8xf32>
    %cst_36 = arith.constant dense<0xFF800000> : vector<8xf32>
    %86 = vector.multi_reduction <maximumf>, %85, %cst_36 [1] : vector<8x8xf32> to vector<8xf32>
    %87 = vector.shape_cast %86 : vector<8xf32> to vector<8x1xf32>
    %88 = vector.broadcast %87 : vector<8x1xf32> to vector<8x8xf32>
    %89 = arith.subf %85, %88 : vector<8x8xf32>
    %90 = math.exp %89 : vector<8x8xf32>
    %cst_37 = arith.constant dense<0.000000e+00> : vector<8xf32>
    %91 = vector.multi_reduction <add>, %90, %cst_37 [1] : vector<8x8xf32> to vector<8xf32>
    %92 = vector.shape_cast %91 : vector<8xf32> to vector<8x1xf32>
    %93 = tpu.reciprocal %92 {approx = true} : vector<8x1xf32> -> vector<8x1xf32>
    %94 = vector.broadcast %93 : vector<8x1xf32> to vector<8x8xf32>
    %95 = arith.mulf %90, %94 : vector<8x8xf32>
    %cst_38 = arith.constant dense<0.000000e+00> : vector<8x8xf32>
    %96 = tpu.matmul %95, %81, %cst_38 {dimension_numbers = #tpu.dot_dimension_numbers<[1], [0], [0], [1], [0, 0, 1, 1], [], []>} : vector<8x8xf32>, vector<8x8xf32>, vector<8x8xf32> -> vector<8x8xf32>
    %c0_39 = arith.constant 0 : index
    %c24 = arith.constant 24 : index
    %97 = vector.load %arg20[%c0_39, %c24] : memref<8x32xf32, #tpu.memory_space<vmem>>, vector<8x8xf32>
    tpu.vector_store %arg20[%c0_39, %c24], %96 {strides = array<i32>} : memref<8x32xf32, #tpu.memory_space<vmem>>, vector<8x8xf32>,
    %c0_40 = arith.constant 0 : index
    %c0_41 = arith.constant 0 : index
    %98 = vector.load %arg20[%c0_40, %c0_41] : memref<8x32xf32, #tpu.memory_space<vmem>>, vector<8x32xf32>
    %c0_42 = arith.constant 0 : index
    %c0_43 = arith.constant 0 : index
    %99 = vector.load %arg8[%c0_42, %c0_43] : memref<32x32xf32, #tpu.memory_space<vmem>>, vector<32x32xf32>
    %cst_44 = arith.constant dense<0.000000e+00> : vector<8x32xf32>
    %100 = tpu.matmul %98, %99, %cst_44 {dimension_numbers = #tpu.dot_dimension_numbers<[1], [0], [0], [1], [0, 0, 1, 1], [], []>} : vector<8x32xf32>, vector<32x32xf32>, vector<8x32xf32> -> vector<8x32xf32>
    %c0_45 = arith.constant 0 : index
    %c0_46 = arith.constant 0 : index
    %101 = vector.load %arg9[%c0_45, %c0_46] : memref<1x32xf32, #tpu.memory_space<vmem>>, vector<1x32xf32>
    %102 = vector.broadcast %101 : vector<1x32xf32> to vector<8x32xf32>
    %103 = arith.addf %100, %102 : vector<8x32xf32>
    %104 = arith.addf %7, %103 : vector<8x32xf32>
    %c0_47 = arith.constant 0 : index
    %c0_48 = arith.constant 0 : index
    %105 = vector.load %arg10[%c0_47, %c0_48] : memref<1x32xf32, #tpu.memory_space<vmem>>, vector<1x32xf32>
    %c0_49 = arith.constant 0 : index
    %c0_50 = arith.constant 0 : index
    %106 = vector.load %arg11[%c0_49, %c0_50] : memref<1x32xf32, #tpu.memory_space<vmem>>, vector<1x32xf32>
    %cst_51 = arith.constant dense<0.000000e+00> : vector<8xf32>
    %107 = vector.multi_reduction <add>, %104, %cst_51 [1] : vector<8x32xf32> to vector<8xf32>
    %108 = vector.shape_cast %107 : vector<8xf32> to vector<8x1xf32>
    %cst_52 = arith.constant 3.200000e+01 : f32
    %109 = vector.broadcast %cst_52 : f32 to vector<8x1xf32>
    %110 = arith.divf %108, %109 : vector<8x1xf32>
    %111 = vector.broadcast %110 : vector<8x1xf32> to vector<8x32xf32>
    %112 = arith.subf %104, %111 : vector<8x32xf32>
    %113 = arith.mulf %112, %112 : vector<8x32xf32>
    %cst_53 = arith.constant dense<0.000000e+00> : vector<8xf32>
    %114 = vector.multi_reduction <add>, %113, %cst_53 [1] : vector<8x32xf32> to vector<8xf32>
    %115 = vector.shape_cast %114 : vector<8xf32> to vector<8x1xf32>
    %cst_54 = arith.constant 3.200000e+01 : f32
    %116 = vector.broadcast %cst_54 : f32 to vector<8x1xf32>
    %117 = arith.divf %115, %116 : vector<8x1xf32>
    %118 = vector.broadcast %110 : vector<8x1xf32> to vector<8x32xf32>
    %119 = arith.subf %104, %118 : vector<8x32xf32>
    %cst_55 = arith.constant 9.99999974E-6 : f32
    %120 = vector.broadcast %cst_55 : f32 to vector<8x1xf32>
    %121 = arith.addf %117, %120 : vector<8x1xf32>
    %122 = math.rsqrt %121 : vector<8x1xf32>
    %123 = vector.broadcast %122 : vector<8x1xf32> to vector<8x32xf32>
    %124 = arith.mulf %119, %123 : vector<8x32xf32>
    %125 = vector.broadcast %105 : vector<1x32xf32> to vector<8x32xf32>
    %126 = arith.mulf %124, %125 : vector<8x32xf32>
    %127 = vector.broadcast %106 : vector<1x32xf32> to vector<8x32xf32>
    %128 = arith.addf %126, %127 : vector<8x32xf32>
    %c0_56 = arith.constant 0 : index
    %c0_57 = arith.constant 0 : index
    %129 = vector.load %arg14[%c0_56, %c0_57] : memref<32x128xf32, #tpu.memory_space<vmem>>, vector<32x128xf32>
    %cst_58 = arith.constant dense<0.000000e+00> : vector<8x128xf32>
    %130 = tpu.matmul %128, %129, %cst_58 {dimension_numbers = #tpu.dot_dimension_numbers<[1], [0], [0], [1], [0, 0, 1, 1], [], []>} : vector<8x32xf32>, vector<32x128xf32>, vector<8x128xf32> -> vector<8x128xf32>
    %c0_59 = arith.constant 0 : index
    %c0_60 = arith.constant 0 : index
    %131 = vector.load %arg15[%c0_59, %c0_60] : memref<1x128xf32, #tpu.memory_space<vmem>>, vector<1x128xf32>
    %132 = vector.broadcast %131 : vector<1x128xf32> to vector<8x128xf32>
    %133 = arith.addf %130, %132 : vector<8x128xf32>
    %cst_61 = arith.constant 0.000000e+00 : f32
    %134 = vector.broadcast %cst_61 : f32 to vector<8x128xf32>
    %135 = arith.maximumf %133, %134 : vector<8x128xf32>
    %c0_62 = arith.constant 0 : index
    %c0_63 = arith.constant 0 : index
    %136 = vector.load %arg16[%c0_62, %c0_63] : memref<128x32xf32, #tpu.memory_space<vmem>>, vector<128x32xf32>
    %cst_64 = arith.constant dense<0.000000e+00> : vector<8x32xf32>
    %137 = tpu.matmul %135, %136, %cst_64 {dimension_numbers = #tpu.dot_dimension_numbers<[1], [0], [0], [1], [0, 0, 1, 1], [], []>} : vector<8x128xf32>, vector<128x32xf32>, vector<8x32xf32> -> vector<8x32xf32>
    %c0_65 = arith.constant 0 : index
    %c0_66 = arith.constant 0 : index
    %138 = vector.load %arg17[%c0_65, %c0_66] : memref<1x32xf32, #tpu.memory_space<vmem>>, vector<1x32xf32>
    %139 = vector.broadcast %138 : vector<1x32xf32> to vector<8x32xf32>
    %140 = arith.addf %137, %139 : vector<8x32xf32>
    %141 = arith.addf %128, %140 : vector<8x32xf32>
    %c0_67 = arith.constant 0 : index
    %c0_68 = arith.constant 0 : index
    %142 = vector.load %arg12[%c0_67, %c0_68] : memref<1x32xf32, #tpu.memory_space<vmem>>, vector<1x32xf32>
    %c0_69 = arith.constant 0 : index
    %c0_70 = arith.constant 0 : index
    %143 = vector.load %arg13[%c0_69, %c0_70] : memref<1x32xf32, #tpu.memory_space<vmem>>, vector<1x32xf32>
    %cst_71 = arith.constant dense<0.000000e+00> : vector<8xf32>
    %144 = vector.multi_reduction <add>, %141, %cst_71 [1] : vector<8x32xf32> to vector<8xf32>
    %145 = vector.shape_cast %144 : vector<8xf32> to vector<8x1xf32>
    %cst_72 = arith.constant 3.200000e+01 : f32
    %146 = vector.broadcast %cst_72 : f32 to vector<8x1xf32>
    %147 = arith.divf %145, %146 : vector<8x1xf32>
    %148 = vector.broadcast %147 : vector<8x1xf32> to vector<8x32xf32>
    %149 = arith.subf %141, %148 : vector<8x32xf32>
    %150 = arith.mulf %149, %149 : vector<8x32xf32>
    %cst_73 = arith.constant dense<0.000000e+00> : vector<8xf32>
    %151 = vector.multi_reduction <add>, %150, %cst_73 [1] : vector<8x32xf32> to vector<8xf32>
    %152 = vector.shape_cast %151 : vector<8xf32> to vector<8x1xf32>
    %cst_74 = arith.constant 3.200000e+01 : f32
    %153 = vector.broadcast %cst_74 : f32 to vector<8x1xf32>
    %154 = arith.divf %152, %153 : vector<8x1xf32>
    %155 = vector.broadcast %147 : vector<8x1xf32> to vector<8x32xf32>
    %156 = arith.subf %141, %155 : vector<8x32xf32>
    %cst_75 = arith.constant 9.99999974E-6 : f32
    %157 = vector.broadcast %cst_75 : f32 to vector<8x1xf32>
    %158 = arith.addf %154, %157 : vector<8x1xf32>
    %159 = math.rsqrt %158 : vector<8x1xf32>
    %160 = vector.broadcast %159 : vector<8x1xf32> to vector<8x32xf32>
    %161 = arith.mulf %156, %160 : vector<8x32xf32>
    %162 = vector.broadcast %142 : vector<1x32xf32> to vector<8x32xf32>
    %163 = arith.mulf %161, %162 : vector<8x32xf32>
    %164 = vector.broadcast %143 : vector<1x32xf32> to vector<8x32xf32>
    %165 = arith.addf %163, %164 : vector<8x32xf32>
    %c0_76 = arith.constant 0 : index
    %c0_77 = arith.constant 0 : index
    %c0_78 = arith.constant 0 : index
    %166 = vector.load %arg18[%c0_76, %c0_77, %c0_78] : memref<1x8x32xf32, #tpu.memory_space<vmem>>, vector<1x8x32xf32>
    %167 = vector.shape_cast %166 : vector<1x8x32xf32> to vector<8x32xf32>
    %168 = vector.shape_cast %165 : vector<8x32xf32> to vector<1x8x32xf32>
    tpu.vector_store %arg18[%c0_76, %c0_77, %c0_78], %168 {strides = array<i32>} : memref<1x8x32xf32, #tpu.memory_space<vmem>>, vector<1x8x32xf32>,
    return
  }
  func.func @transform_0(%arg0: i32, %arg1: i32) -> (i32, i32, i32) {
    %c0_i32 = arith.constant 0 : i32
    %c0_i32_0 = arith.constant 0 : i32
    %c0_i32_1 = arith.constant 0 : i32
    return %arg0, %c0_i32, %c0_i32_0 : i32, i32, i32
  }
  func.func @transform_1(%arg0: i32, %arg1: i32) -> (i32, i32, i32) {
    %c0_i32 = arith.constant 0 : i32
    %c0_i32_0 = arith.constant 0 : i32
    return %arg0, %arg1, %c0_i32 : i32, i32, i32
  }
  func.func @transform_2(%arg0: i32, %arg1: i32) -> (i32, i32) {
    %c0_i32 = arith.constant 0 : i32
    %c0_i32_0 = arith.constant 0 : i32
    %c0_i32_1 = arith.constant 0 : i32
    return %c0_i32, %c0_i32_0 : i32, i32
  }
  func.func @transform_3(%arg0: i32, %arg1: i32) -> (i32, i32) {
    %c0_i32 = arith.constant 0 : i32
    %c0_i32_0 = arith.constant 0 : i32
    %c0_i32_1 = arith.constant 0 : i32
    return %c0_i32, %c0_i32_0 : i32, i32
  }
  func.func @transform_4(%arg0: i32, %arg1: i32) -> (i32, i32) {
    %c0_i32 = arith.constant 0 : i32
    %c0_i32_0 = arith.constant 0 : i32
    %c0_i32_1 = arith.constant 0 : i32
    return %c0_i32, %c0_i32_0 : i32, i32
  }
  func.func @transform_5(%arg0: i32, %arg1: i32) -> (i32, i32) {
    %c0_i32 = arith.constant 0 : i32
    %c0_i32_0 = arith.constant 0 : i32
    %c0_i32_1 = arith.constant 0 : i32
    return %c0_i32, %c0_i32_0 : i32, i32
  }
  func.func @transform_6(%arg0: i32, %arg1: i32) -> (i32, i32) {
    %c0_i32 = arith.constant 0 : i32
    %c0_i32_0 = arith.constant 0 : i32
    %c0_i32_1 = arith.constant 0 : i32
    return %c0_i32, %c0_i32_0 : i32, i32
  }
  func.func @transform_7(%arg0: i32, %arg1: i32) -> (i32, i32) {
    %c0_i32 = arith.constant 0 : i32
    %c0_i32_0 = arith.constant 0 : i32
    %c0_i32_1 = arith.constant 0 : i32
    return %c0_i32, %c0_i32_0 : i32, i32
  }
  func.func @transform_8(%arg0: i32, %arg1: i32) -> (i32, i32) {
    %c0_i32 = arith.constant 0 : i32
    %c0_i32_0 = arith.constant 0 : i32
    %c0_i32_1 = arith.constant 0 : i32
    return %c0_i32, %c0_i32_0 : i32, i32
  }
  func.func @transform_9(%arg0: i32, %arg1: i32) -> (i32, i32) {
    %c0_i32 = arith.constant 0 : i32
    %c0_i32_0 = arith.constant 0 : i32
    %c0_i32_1 = arith.constant 0 : i32
    return %c0_i32, %c0_i32_0 : i32, i32
  }
  func.func @transform_10(%arg0: i32, %arg1: i32) -> (i32, i32) {
    %c0_i32 = arith.constant 0 : i32
    %c0_i32_0 = arith.constant 0 : i32
    %c0_i32_1 = arith.constant 0 : i32
    return %c0_i32, %c0_i32_0 : i32, i32
  }
  func.func @transform_11(%arg0: i32, %arg1: i32) -> (i32, i32) {
    %c0_i32 = arith.constant 0 : i32
    %c0_i32_0 = arith.constant 0 : i32
    %c0_i32_1 = arith.constant 0 : i32
    return %c0_i32, %c0_i32_0 : i32, i32
  }
  func.func @transform_12(%arg0: i32, %arg1: i32) -> (i32, i32) {
    %c0_i32 = arith.constant 0 : i32
    %c0_i32_0 = arith.constant 0 : i32
    %c0_i32_1 = arith.constant 0 : i32
    return %c0_i32, %c0_i32_0 : i32, i32
  }
  func.func @transform_13(%arg0: i32, %arg1: i32) -> (i32, i32) {
    %c0_i32 = arith.constant 0 : i32
    %c0_i32_0 = arith.constant 0 : i32
    %c0_i32_1 = arith.constant 0 : i32
    return %c0_i32, %c0_i32_0 : i32, i32
  }
  func.func @transform_14(%arg0: i32, %arg1: i32) -> (i32, i32) {
    %c0_i32 = arith.constant 0 : i32
    %c0_i32_0 = arith.constant 0 : i32
    %c0_i32_1 = arith.constant 0 : i32
    return %c0_i32, %c0_i32_0 : i32, i32
  }
  func.func @transform_15(%arg0: i32, %arg1: i32) -> (i32, i32) {
    %c0_i32 = arith.constant 0 : i32
    %c0_i32_0 = arith.constant 0 : i32
    %c0_i32_1 = arith.constant 0 : i32
    return %c0_i32, %c0_i32_0 : i32, i32
  }
  func.func @transform_16(%arg0: i32, %arg1: i32) -> (i32, i32, i32) {
    %c0_i32 = arith.constant 0 : i32
    %c0_i32_0 = arith.constant 0 : i32
    return %arg0, %arg1, %c0_i32 : i32, i32, i32
  }
}

</mosaic_0001>

<llo_original>
// kernel: tpu_custom_call.1
$region0: #{tpu_custom_call.1}
  #allocation0 [shape = 'u32[]', space=smem, size = 0x4, offset = 0x4, fixed_abs, tag = 'smem constant byte address 0x4 - core index']
  #allocation1 [shape = 'u32[144,128]{1,0:T(1,128)}', space=vmem, size = 0x12000, scoped, tag = 'internal scratch']
  #allocation2 [shape = 'f32[8,64]{1,0:T(8,128)}', space=vmem, size = 0x1000, scoped, tag = 'scratch operand']
  #allocation3 [shape = 'f32[8,32]{1,0:T(8,128)}', space=vmem, size = 0x1000, scoped, tag = 'scratch operand']
  %s0 = inlined_call_operand.vmem [shape: f32[2,8,32], index: 0, kind: input, shape index: {}]
  %s1 = inlined_call_operand.vmem [shape: f32[2,8,8], index: 1, kind: input, shape index: {}]
  %s2 = inlined_call_operand.vmem [shape: f32[32,32], index: 2, kind: input, shape index: {}]
  %s3 = inlined_call_operand.vmem [shape: f32[1,32], index: 3, kind: input, shape index: {}]
  %s4 = inlined_call_operand.vmem [shape: f32[32,64], index: 4, kind: input, shape index: {}]
  %s5 = inlined_call_operand.vmem [shape: f32[1,64], index: 5, kind: input, shape index: {}]
  %s6 = inlined_call_operand.vmem [shape: f32[32,32], index: 6, kind: input, shape index: {}]
  %s7 = inlined_call_operand.vmem [shape: f32[1,32], index: 7, kind: input, shape index: {}]
  %s8 = inlined_call_operand.vmem [shape: f32[1,32], index: 8, kind: input, shape index: {}]
  %s9 = inlined_call_operand.vmem [shape: f32[1,32], index: 9, kind: input, shape index: {}]
  %s10 = inlined_call_operand.vmem [shape: f32[1,32], index: 10, kind: input, shape index: {}]
  %s11 = inlined_call_operand.vmem [shape: f32[1,32], index: 11, kind: input, shape index: {}]
  %s12 = inlined_call_operand.vmem [shape: f32[32,128], index: 12, kind: input, shape index: {}]
  %s13 = inlined_call_operand.vmem [shape: f32[1,128], index: 13, kind: input, shape index: {}]
  %s14 = inlined_call_operand.vmem [shape: f32[128,32], index: 14, kind: input, shape index: {}]
  %s15 = inlined_call_operand.vmem [shape: f32[1,32], index: 15, kind: input, shape index: {}]
  %s16 = inlined_call_operand.hbm [shape: f32[2,8,32], index: 16, kind: output, shape index: {}]
  %s17 = sld [smem:[#allocation0]]
  $region101: #{tpu_custom_call.1} parent=0
    _
  %s19 = ssub.s32 1, %s17
  %s20 = scalar_select 0, %s19, %s17
  $region1: #{tpu_custom_call.1} parent=0
    #allocation4 [shape = 'u8[8192]{0}', space=vmem, size = 0x2000, scoped, tag = 'output window, operand 0']
    #allocation5 [shape = 's32[2]{0}', space=sflag, size = 0x8, scoped, tag = 'scoped memory for tpu_custom_call.1']
    %21 = vsyncpa [#allocation5], 0
    %s22 = scalar_lea.sflag [#allocation5], 1
    %23 = vsyncpa %s22, 0
    loop: start=0, step=1, limit=4
    $region2: #{tpu_custom_call.1} parent=1 // loop_pre_header
      _
    $region3: #{tpu_custom_call.1} parent=1 // loop_header
      %s25 = sphi 0, %s29
      %p26 = scmp.ge.s32.totalorder %s25, 4
      %s32 = sphi 0, %s44
      %s33 = sphi 0, %s40
      %s34 = sphi 0, %s32
      %s35 = sphi 0, %s33
      %s36 = sphi 0, %s34
      %s37 = sphi 0, %s35
      %s47 = sphi 0, %s49
      %s50 = sphi 0, %s47
      %s51 = sphi 0, %s50
      %s67 = sphi 0, %s51
      %s75 = sphi 0, %s77
      %s78 = sphi 0, %s75
      %s79 = sphi 0, %s78
      %s95 = sphi 0, %s79
      %s99 = sphi 0, %s99
      %s101 = sphi 0, %s99
      %s102 = sphi 0, %s101
      %s116 = sphi 0, %s102
      %s120 = sphi 0, %s120
      %s122 = sphi 0, %s120
      %s123 = sphi 0, %s122
      %s137 = sphi 0, %s123
      %s141 = sphi 0, %s141
      %s143 = sphi 0, %s141
      %s144 = sphi 0, %s143
      %s158 = sphi 0, %s144
      %s162 = sphi 0, %s162
      %s164 = sphi 0, %s162
      %s165 = sphi 0, %s164
      %s179 = sphi 0, %s165
      %s183 = sphi 0, %s183
      %s185 = sphi 0, %s183
      %s186 = sphi 0, %s185
      %s200 = sphi 0, %s186
      %s204 = sphi 0, %s204
      %s206 = sphi 0, %s204
      %s207 = sphi 0, %s206
      %s221 = sphi 0, %s207
      %s225 = sphi 0, %s225
      %s227 = sphi 0, %s225
      %s228 = sphi 0, %s227
      %s242 = sphi 0, %s228
      %s246 = sphi 0, %s246
      %s248 = sphi 0, %s246
      %s249 = sphi 0, %s248
      %s263 = sphi 0, %s249
      %s267 = sphi 0, %s267
      %s269 = sphi 0, %s267
      %s270 = sphi 0, %s269
      %s284 = sphi 0, %s270
      %s288 = sphi 0, %s288
      %s290 = sphi 0, %s288
      %s291 = sphi 0, %s290
      %s305 = sphi 0, %s291
      %s309 = sphi 0, %s309
      %s311 = sphi 0, %s309
      %s312 = sphi 0, %s311
      %s326 = sphi 0, %s312
      %s330 = sphi 0, %s330
      %s332 = sphi 0, %s330
      %s333 = sphi 0, %s332
      %s347 = sphi 0, %s333
      %s351 = sphi 0, %s351
      %s353 = sphi 0, %s351
      %s354 = sphi 0, %s353
      %s368 = sphi 0, %s354
      %s372 = sphi 0, %s372
      %s374 = sphi 0, %s372
      %s375 = sphi 0, %s374
      %s389 = sphi 0, %s375
      %s397 = sphi 0, %s399
      %s400 = sphi 0, %s397
      %s401 = sphi 0, %s400
      %s417 = sphi 0, %s401
    $region4: #{tpu_custom_call.1} parent=1 // loop_header_branch
      %28 = sbr.rel (%p26) target = $region8
    $region5: #{tpu_custom_call.1} parent=1 // loop_body
      %s30 = ssub.s32 %s25, 1
      %s31 = ssub.s32 %s25, 2
      %s38 = sadd.s32 1, %s33
      %p39 = scmp.ge.s32.totalorder %s38, 1
      %s40 = scalar_select %p39, 0, %s38
      %s41 = sadd.s32 1, %s32
      %s42 = scalar_select %p39, %s41, %s32
      %p43 = scmp.ge.s32.totalorder %s42, 2
      %s44 = scalar_select %p43, 0, %s42
      %s45 = ssub.s32 %s32, %s44
      %p46 = scmp.eq.s32.totalorder %s45, 0
      %s48 = sadd.s32 %s47, 1
      %s49 = scalar_select %p46, %s47, %s48
      %p52 = pneg %p46
      %p53 = scmp.eq.s32.totalorder %s25, 1
      %p54 = por %p52, %p53
      %p55 = scmp.ne.s32.totalorder %s47, %s50
      %p56 = scmp.eq.s32.totalorder %s25, 0
      %p57 = por %p55, %p56
      %p58 = scmp.ne.s32.totalorder %s47, %s50
      %p59 = scmp.eq.s32.totalorder %s30, 1
      %p60 = por %p58, %p59
      %p61 = scmp.ne.s32.totalorder %s50, %s51
      %p62 = scmp.eq.s32.totalorder %s30, 0
      %p63 = por %p61, %p62
      %p64 = scmp.ne.s32.totalorder %s50, %s51
      %p65 = scmp.eq.s32.totalorder %s31, 1
      %p66 = por %p64, %p65
      %p68 = scmp.ne.s32.totalorder %s51, %s67
      %p69 = scmp.eq.s32.totalorder %s31, 0
      %p70 = por %p68, %p69
      %s71 = ssub.s32 %s32, %s44
      %s72 = ssub.s32 %s33, %s40
      %s73 = sor.u32 %s71, %s72
      %p74 = scmp.eq.s32.totalorder %s73, 0
      %s76 = sadd.s32 %s75, 1
      %s77 = scalar_select %p74, %s75, %s76
      %p80 = pneg %p74
      %p81 = scmp.eq.s32.totalorder %s25, 1
      %p82 = por %p80, %p81
      %p83 = scmp.ne.s32.totalorder %s75, %s78
      %p84 = scmp.eq.s32.totalorder %s25, 0
      %p85 = por %p83, %p84
      %p86 = scmp.ne.s32.totalorder %s75, %s78
      %p87 = scmp.eq.s32.totalorder %s30, 1
      %p88 = por %p86, %p87
      %p89 = scmp.ne.s32.totalorder %s78, %s79
      %p90 = scmp.eq.s32.totalorder %s30, 0
      %p91 = por %p89, %p90
      %p92 = scmp.ne.s32.totalorder %s78, %s79
      %p93 = scmp.eq.s32.totalorder %s31, 1
      %p94 = por %p92, %p93
      %p96 = scmp.ne.s32.totalorder %s79, %s95
      %p97 = scmp.eq.s32.totalorder %s31, 0
      %p98 = por %p96, %p97
      %s100 = sadd.s32 %s99, 1
      %p103 = scmp.eq.s32.totalorder %s25, 1
      %p104 = scmp.ne.s32.totalorder %s99, %s101
      %p105 = scmp.eq.s32.totalorder %s25, 0
      %p106 = por %p104, %p105
      %p107 = scmp.ne.s32.totalorder %s99, %s101
      %p108 = scmp.eq.s32.totalorder %s30, 1
      %p109 = por %p107, %p108
      %p110 = scmp.ne.s32.totalorder %s101, %s102
      %p111 = scmp.eq.s32.totalorder %s30, 0
      %p112 = por %p110, %p111
      %p113 = scmp.ne.s32.totalorder %s101, %s102
      %p114 = scmp.eq.s32.totalorder %s31, 1
      %p115 = por %p113, %p114
      %p117 = scmp.ne.s32.totalorder %s102, %s116
      %p118 = scmp.eq.s32.totalorder %s31, 0
      %p119 = por %p117, %p118
      %s121 = sadd.s32 %s120, 1
      %p124 = scmp.eq.s32.totalorder %s25, 1
      %p125 = scmp.ne.s32.totalorder %s120, %s122
      %p126 = scmp.eq.s32.totalorder %s25, 0
      %p127 = por %p125, %p126
      %p128 = scmp.ne.s32.totalorder %s120, %s122
      %p129 = scmp.eq.s32.totalorder %s30, 1
      %p130 = por %p128, %p129
      %p131 = scmp.ne.s32.totalorder %s122, %s123
      %p132 = scmp.eq.s32.totalorder %s30, 0
      %p133 = por %p131, %p132
      %p134 = scmp.ne.s32.totalorder %s122, %s123
      %p135 = scmp.eq.s32.totalorder %s31, 1
      %p136 = por %p134, %p135
      %p138 = scmp.ne.s32.totalorder %s123, %s137
      %p139 = scmp.eq.s32.totalorder %s31, 0
      %p140 = por %p138, %p139
      %s142 = sadd.s32 %s141, 1
      %p145 = scmp.eq.s32.totalorder %s25, 1
      %p146 = scmp.ne.s32.totalorder %s141, %s143
      %p147 = scmp.eq.s32.totalorder %s25, 0
      %p148 = por %p146, %p147
      %p149 = scmp.ne.s32.totalorder %s141, %s143
      %p150 = scmp.eq.s32.totalorder %s30, 1
      %p151 = por %p149, %p150
      %p152 = scmp.ne.s32.totalorder %s143, %s144
      %p153 = scmp.eq.s32.totalorder %s30, 0
      %p154 = por %p152, %p153
      %p155 = scmp.ne.s32.totalorder %s143, %s144
      %p156 = scmp.eq.s32.totalorder %s31, 1
      %p157 = por %p155, %p156
      %p159 = scmp.ne.s32.totalorder %s144, %s158
      %p160 = scmp.eq.s32.totalorder %s31, 0
      %p161 = por %p159, %p160
      %s163 = sadd.s32 %s162, 1
      %p166 = scmp.eq.s32.totalorder %s25, 1
      %p167 = scmp.ne.s32.totalorder %s162, %s164
      %p168 = scmp.eq.s32.totalorder %s25, 0
      %p169 = por %p167, %p168
      %p170 = scmp.ne.s32.totalorder %s162, %s164
      %p171 = scmp.eq.s32.totalorder %s30, 1
      %p172 = por %p170, %p171
      %p173 = scmp.ne.s32.totalorder %s164, %s165
      %p174 = scmp.eq.s32.totalorder %s30, 0
      %p175 = por %p173, %p174
      %p176 = scmp.ne.s32.totalorder %s164, %s165
      %p177 = scmp.eq.s32.totalorder %s31, 1
      %p178 = por %p176, %p177
      %p180 = scmp.ne.s32.totalorder %s165, %s179
      %p181 = scmp.eq.s32.totalorder %s31, 0
      %p182 = por %p180, %p181
      %s184 = sadd.s32 %s183, 1
      %p187 = scmp.eq.s32.totalorder %s25, 1
      %p188 = scmp.ne.s32.totalorder %s183, %s185
      %p189 = scmp.eq.s32.totalorder %s25, 0
      %p190 = por %p188, %p189
      %p191 = scmp.ne.s32.totalorder %s183, %s185
      %p192 = scmp.eq.s32.totalorder %s30, 1
      %p193 = por %p191, %p192
      %p194 = scmp.ne.s32.totalorder %s185, %s186
      %p195 = scmp.eq.s32.totalorder %s30, 0
      %p196 = por %p194, %p195
      %p197 = scmp.ne.s32.totalorder %s185, %s186
      %p198 = scmp.eq.s32.totalorder %s31, 1
      %p199 = por %p197, %p198
      %p201 = scmp.ne.s32.totalorder %s186, %s200
      %p202 = scmp.eq.s32.totalorder %s31, 0
      %p203 = por %p201, %p202
      %s205 = sadd.s32 %s204, 1
      %p208 = scmp.eq.s32.totalorder %s25, 1
      %p209 = scmp.ne.s32.totalorder %s204, %s206
      %p210 = scmp.eq.s32.totalorder %s25, 0
      %p211 = por %p209, %p210
      %p212 = scmp.ne.s32.totalorder %s204, %s206
      %p213 = scmp.eq.s32.totalorder %s30, 1
      %p214 = por %p212, %p213
      %p215 = scmp.ne.s32.totalorder %s206, %s207
      %p216 = scmp.eq.s32.totalorder %s30, 0
      %p217 = por %p215, %p216
      %p218 = scmp.ne.s32.totalorder %s206, %s207
      %p219 = scmp.eq.s32.totalorder %s31, 1
      %p220 = por %p218, %p219
      %p222 = scmp.ne.s32.totalorder %s207, %s221
      %p223 = scmp.eq.s32.totalorder %s31, 0
      %p224 = por %p222, %p223
      %s226 = sadd.s32 %s225, 1
      %p229 = scmp.eq.s32.totalorder %s25, 1
      %p230 = scmp.ne.s32.totalorder %s225, %s227
      %p231 = scmp.eq.s32.totalorder %s25, 0
      %p232 = por %p230, %p231
      %p233 = scmp.ne.s32.totalorder %s225, %s227
      %p234 = scmp.eq.s32.totalorder %s30, 1
      %p235 = por %p233, %p234
      %p236 = scmp.ne.s32.totalorder %s227, %s228
      %p237 = scmp.eq.s32.totalorder %s30, 0
      %p238 = por %p236, %p237
      %p239 = scmp.ne.s32.totalorder %s227, %s228
      %p240 = scmp.eq.s32.totalorder %s31, 1
      %p241 = por %p239, %p240
      %p243 = scmp.ne.s32.totalorder %s228, %s242
      %p244 = scmp.eq.s32.totalorder %s31, 0
      %p245 = por %p243, %p244
      %s247 = sadd.s32 %s246, 1
      %p250 = scmp.eq.s32.totalorder %s25, 1
      %p251 = scmp.ne.s32.totalorder %s246, %s248
      %p252 = scmp.eq.s32.totalorder %s25, 0
      %p253 = por %p251, %p252
      %p254 = scmp.ne.s32.totalorder %s246, %s248
      %p255 = scmp.eq.s32.totalorder %s30, 1
      %p256 = por %p254, %p255
      %p257 = scmp.ne.s32.totalorder %s248, %s249
      %p258 = scmp.eq.s32.totalorder %s30, 0
      %p259 = por %p257, %p258
      %p260 = scmp.ne.s32.totalorder %s248, %s249
      %p261 = scmp.eq.s32.totalorder %s31, 1
      %p262 = por %p260, %p261
      %p264 = scmp.ne.s32.totalorder %s249, %s263
      %p265 = scmp.eq.s32.totalorder %s31, 0
      %p266 = por %p264, %p265
      %s268 = sadd.s32 %s267, 1
      %p271 = scmp.eq.s32.totalorder %s25, 1
      %p272 = scmp.ne.s32.totalorder %s267, %s269
      %p273 = scmp.eq.s32.totalorder %s25, 0
      %p274 = por %p272, %p273
      %p275 = scmp.ne.s32.totalorder %s267, %s269
      %p276 = scmp.eq.s32.totalorder %s30, 1
      %p277 = por %p275, %p276
      %p278 = scmp.ne.s32.totalorder %s269, %s270
      %p279 = scmp.eq.s32.totalorder %s30, 0
      %p280 = por %p278, %p279
      %p281 = scmp.ne.s32.totalorder %s269, %s270
      %p282 = scmp.eq.s32.totalorder %s31, 1
      %p283 = por %p281, %p282
      %p285 = scmp.ne.s32.totalorder %s270, %s284
      %p286 = scmp.eq.s32.totalorder %s31, 0
      %p287 = por %p285, %p286
      %s289 = sadd.s32 %s288, 1
      %p292 = scmp.eq.s32.totalorder %s25, 1
      %p293 = scmp.ne.s32.totalorder %s288, %s290
      %p294 = scmp.eq.s32.totalorder %s25, 0
      %p295 = por %p293, %p294
      %p296 = scmp.ne.s32.totalorder %s288, %s290
      %p297 = scmp.eq.s32.totalorder %s30, 1
      %p298 = por %p296, %p297
      %p299 = scmp.ne.s32.totalorder %s290, %s291
      %p300 = scmp.eq.s32.totalorder %s30, 0
      %p301 = por %p299, %p300
      %p302 = scmp.ne.s32.totalorder %s290, %s291
      %p303 = scmp.eq.s32.totalorder %s31, 1
      %p304 = por %p302, %p303
      %p306 = scmp.ne.s32.totalorder %s291, %s305
      %p307 = scmp.eq.s32.totalorder %s31, 0
      %p308 = por %p306, %p307
      %s310 = sadd.s32 %s309, 1
      %p313 = scmp.eq.s32.totalorder %s25, 1
      %p314 = scmp.ne.s32.totalorder %s309, %s311
      %p315 = scmp.eq.s32.totalorder %s25, 0
      %p316 = por %p314, %p315
      %p317 = scmp.ne.s32.totalorder %s309, %s311
      %p318 = scmp.eq.s32.totalorder %s30, 1
      %p319 = por %p317, %p318
      %p320 = scmp.ne.s32.totalorder %s311, %s312
      %p321 = scmp.eq.s32.totalorder %s30, 0
      %p322 = por %p320, %p321
      %p323 = scmp.ne.s32.totalorder %s311, %s312
      %p324 = scmp.eq.s32.totalorder %s31, 1
      %p325 = por %p323, %p324
      %p327 = scmp.ne.s32.totalorder %s312, %s326
      %p328 = scmp.eq.s32.totalorder %s31, 0
      %p329 = por %p327, %p328
      %s331 = sadd.s32 %s330, 1
      %p334 = scmp.eq.s32.totalorder %s25, 1
      %p335 = scmp.ne.s32.totalorder %s330, %s332
      %p336 = scmp.eq.s32.totalorder %s25, 0
      %p337 = por %p335, %p336
      %p338 = scmp.ne.s32.totalorder %s330, %s332
      %p339 = scmp.eq.s32.totalorder %s30, 1
      %p340 = por %p338, %p339
      %p341 = scmp.ne.s32.totalorder %s332, %s333
      %p342 = scmp.eq.s32.totalorder %s30, 0
      %p343 = por %p341, %p342
      %p344 = scmp.ne.s32.totalorder %s332, %s333
      %p345 = scmp.eq.s32.totalorder %s31, 1
      %p346 = por %p344, %p345
      %p348 = scmp.ne.s32.totalorder %s333, %s347
      %p349 = scmp.eq.s32.totalorder %s31, 0
      %p350 = por %p348, %p349
      %s352 = sadd.s32 %s351, 1
      %p355 = scmp.eq.s32.totalorder %s25, 1
      %p356 = scmp.ne.s32.totalorder %s351, %s353
      %p357 = scmp.eq.s32.totalorder %s25, 0
      %p358 = por %p356, %p357
      %p359 = scmp.ne.s32.totalorder %s351, %s353
      %p360 = scmp.eq.s32.totalorder %s30, 1
      %p361 = por %p359, %p360
      %p362 = scmp.ne.s32.totalorder %s353, %s354
      %p363 = scmp.eq.s32.totalorder %s30, 0
      %p364 = por %p362, %p363
      %p365 = scmp.ne.s32.totalorder %s353, %s354
      %p366 = scmp.eq.s32.totalorder %s31, 1
      %p367 = por %p365, %p366
      %p369 = scmp.ne.s32.totalorder %s354, %s368
      %p370 = scmp.eq.s32.totalorder %s31, 0
      %p371 = por %p369, %p370
      %s373 = sadd.s32 %s372, 1
      %p376 = scmp.eq.s32.totalorder %s25, 1
      %p377 = scmp.ne.s32.totalorder %s372, %s374
      %p378 = scmp.eq.s32.totalorder %s25, 0
      %p379 = por %p377, %p378
      %p380 = scmp.ne.s32.totalorder %s372, %s374
      %p381 = scmp.eq.s32.totalorder %s30, 1
      %p382 = por %p380, %p381
      %p383 = scmp.ne.s32.totalorder %s374, %s375
      %p384 = scmp.eq.s32.totalorder %s30, 0
      %p385 = por %p383, %p384
      %p386 = scmp.ne.s32.totalorder %s374, %s375
      %p387 = scmp.eq.s32.totalorder %s31, 1
      %p388 = por %p386, %p387
      %p390 = scmp.ne.s32.totalorder %s375, %s389
      %p391 = scmp.eq.s32.totalorder %s31, 0
      %p392 = por %p390, %p391
      %s393 = ssub.s32 %s32, %s44
      %s394 = ssub.s32 %s33, %s40
      %s395 = sor.u32 %s393, %s394
      %p396 = scmp.eq.s32.totalorder %s395, 0
      %s398 = sadd.s32 %s397, 1
      %s399 = scalar_select %p396, %s397, %s398
      %p402 = pneg %p396
      %p403 = scmp.eq.s32.totalorder %s25, 1
      %p404 = por %p402, %p403
      %p405 = scmp.ne.s32.totalorder %s397, %s400
      %p406 = scmp.eq.s32.totalorder %s25, 0
      %p407 = por %p405, %p406
      %p408 = scmp.ne.s32.totalorder %s397, %s400
      %p409 = scmp.eq.s32.totalorder %s30, 1
      %p410 = por %p408, %p409
      %p411 = scmp.ne.s32.totalorder %s400, %s401
      %p412 = scmp.eq.s32.totalorder %s30, 0
      %p413 = por %p411, %p412
      %p414 = scmp.ne.s32.totalorder %s400, %s401
      %p415 = scmp.eq.s32.totalorder %s31, 1
      %p416 = por %p414, %p415
      %p418 = scmp.ne.s32.totalorder %s401, %s417
      %p419 = scmp.eq.s32.totalorder %s31, 0
      %p420 = por %p418, %p419
      %p421 = scmp.le.s32.totalorder 1, %s25
      %p422 = scmp.lt.s32.totalorder %s25, 3
      %p423 = pnand %p421, %p422
      %p424 = pneg %p423
      // Predicated region
      $region9: #{tpu_custom_call.1} parent=5 // pred_check
        _
      $region10: #{tpu_custom_call.1} parent=5 // pred_check_branch
        %426 = sbr.rel (%p423) target = $region12
      $region11: #{tpu_custom_call.1} parent=5 // pred_region
        %s427 = ssub.s32 %s25, 1
        // Predicated region
        $region13: #{tpu_custom_call.1} parent=11 // pred_check
          %p428 = pneg %p63
        $region14: #{tpu_custom_call.1} parent=11 // pred_check_branch
          %430 = sbr.rel (%p428) target = $region16
        $region15: #{tpu_custom_call.1} parent=11 // pred_region
          %p431 = scmp.lt.s32.totalorder %s34, 1
          %s432 = scalar_select %p431, %s34, 1
          %s433 = smul.addr %s432, 8
          %s434 = scalar_lea.vmem %s0, %s433
        $region16: #{tpu_custom_call.1} parent=11 // pred_fallthru
          _
        // Predicated region
        $region17: #{tpu_custom_call.1} parent=11 // pred_check
          %p435 = pneg %p112
        $region18: #{tpu_custom_call.1} parent=11 // pred_check_branch
          %437 = sbr.rel (%p435) target = $region20
        $region19: #{tpu_custom_call.1} parent=11 // pred_region
          _
        $region20: #{tpu_custom_call.1} parent=11 // pred_fallthru
          _
        // Predicated region
        $region21: #{tpu_custom_call.1} parent=11 // pred_check
          %p438 = pneg %p133
        $region22: #{tpu_custom_call.1} parent=11 // pred_check_branch
          %440 = sbr.rel (%p438) target = $region24
        $region23: #{tpu_custom_call.1} parent=11 // pred_region
          _
        $region24: #{tpu_custom_call.1} parent=11 // pred_fallthru
          _
        // Predicated region
        $region25: #{tpu_custom_call.1} parent=11 // pred_check
          %p441 = pneg %p154
        $region26: #{tpu_custom_call.1} parent=11 // pred_check_branch
          %443 = sbr.rel (%p441) target = $region28
        $region27: #{tpu_custom_call.1} parent=11 // pred_region
          _
        $region28: #{tpu_custom_call.1} parent=11 // pred_fallthru
          _
        // Predicated region
        $region29: #{tpu_custom_call.1} parent=11 // pred_check
          %p444 = pneg %p175
        $region30: #{tpu_custom_call.1} parent=11 // pred_check_branch
          %446 = sbr.rel (%p444) target = $region32
        $region31: #{tpu_custom_call.1} parent=11 // pred_region
          _
        $region32: #{tpu_custom_call.1} parent=11 // pred_fallthru
          _
        // Predicated region
        $region33: #{tpu_custom_call.1} parent=11 // pred_check
          %p447 = pneg %p196
        $region34: #{tpu_custom_call.1} parent=11 // pred_check_branch
          %449 = sbr.rel (%p447) target = $region36
        $region35: #{tpu_custom_call.1} parent=11 // pred_region
          _
        $region36: #{tpu_custom_call.1} parent=11 // pred_fallthru
          _
        // Predicated region
        $region37: #{tpu_custom_call.1} parent=11 // pred_check
          %p450 = pneg %p217
        $region38: #{tpu_custom_call.1} parent=11 // pred_check_branch
          %452 = sbr.rel (%p450) target = $region40
        $region39: #{tpu_custom_call.1} parent=11 // pred_region
          _
        $region40: #{tpu_custom_call.1} parent=11 // pred_fallthru
          _
        // Predicated region
        $region41: #{tpu_custom_call.1} parent=11 // pred_check
          %p453 = pneg %p238
        $region42: #{tpu_custom_call.1} parent=11 // pred_check_branch
          %455 = sbr.rel (%p453) target = $region44
        $region43: #{tpu_custom_call.1} parent=11 // pred_region
          _
        $region44: #{tpu_custom_call.1} parent=11 // pred_fallthru
          _
        // Predicated region
        $region45: #{tpu_custom_call.1} parent=11 // pred_check
          %p456 = pneg %p259
        $region46: #{tpu_custom_call.1} parent=11 // pred_check_branch
          %458 = sbr.rel (%p456) target = $region48
        $region47: #{tpu_custom_call.1} parent=11 // pred_region
          _
        $region48: #{tpu_custom_call.1} parent=11 // pred_fallthru
          _
        // Predicated region
        $region49: #{tpu_custom_call.1} parent=11 // pred_check
          %p459 = pneg %p280
        $region50: #{tpu_custom_call.1} parent=11 // pred_check_branch
          %461 = sbr.rel (%p459) target = $region52
        $region51: #{tpu_custom_call.1} parent=11 // pred_region
          _
        $region52: #{tpu_custom_call.1} parent=11 // pred_fallthru
          _
        // Predicated region
        $region53: #{tpu_custom_call.1} parent=11 // pred_check
          %p462 = pneg %p301
        $region54: #{tpu_custom_call.1} parent=11 // pred_check_branch
          %464 = sbr.rel (%p462) target = $region56
        $region55: #{tpu_custom_call.1} parent=11 // pred_region
          _
        $region56: #{tpu_custom_call.1} parent=11 // pred_fallthru
          _
        // Predicated region
        $region57: #{tpu_custom_call.1} parent=11 // pred_check
          %p465 = pneg %p322
        $region58: #{tpu_custom_call.1} parent=11 // pred_check_branch
          %467 = sbr.rel (%p465) target = $region60
        $region59: #{tpu_custom_call.1} parent=11 // pred_region
          _
        $region60: #{tpu_custom_call.1} parent=11 // pred_fallthru
          _
        // Predicated region
        $region61: #{tpu_custom_call.1} parent=11 // pred_check
          %p468 = pneg %p343
        $region62: #{tpu_custom_call.1} parent=11 // pred_check_branch
          %470 = sbr.rel (%p468) target = $region64
        $region63: #{tpu_custom_call.1} parent=11 // pred_region
          _
        $region64: #{tpu_custom_call.1} parent=11 // pred_fallthru
          _
        // Predicated region
        $region65: #{tpu_custom_call.1} parent=11 // pred_check
          %p471 = pneg %p364
        $region66: #{tpu_custom_call.1} parent=11 // pred_check_branch
          %473 = sbr.rel (%p471) target = $region68
        $region67: #{tpu_custom_call.1} parent=11 // pred_region
          _
        $region68: #{tpu_custom_call.1} parent=11 // pred_fallthru
          _
        // Predicated region
        $region69: #{tpu_custom_call.1} parent=11 // pred_check
          %p474 = pneg %p385
        $region70: #{tpu_custom_call.1} parent=11 // pred_check_branch
          %476 = sbr.rel (%p474) target = $region72
        $region71: #{tpu_custom_call.1} parent=11 // pred_region
          _
        $region72: #{tpu_custom_call.1} parent=11 // pred_fallthru
          _
      $region12: #{tpu_custom_call.1} parent=5 // pred_fallthru
        _
      %p477 = scmp.lt.s32.totalorder %s25, 2
      // Predicated region
      $region73: #{tpu_custom_call.1} parent=5 // pred_check
        %p478 = pneg %p477
      $region74: #{tpu_custom_call.1} parent=5 // pred_check_branch
        %480 = sbr.rel (%p478) target = $region76
      $region75: #{tpu_custom_call.1} parent=5 // pred_region
        // Predicated region
        $region77: #{tpu_custom_call.1} parent=75 // pred_check
          %p481 = pneg %p85
        $region78: #{tpu_custom_call.1} parent=75 // pred_check_branch
          %483 = sbr.rel (%p481) target = $region80
        $region79: #{tpu_custom_call.1} parent=75 // pred_region
          %p484 = scmp.lt.s32.totalorder %s32, 1
          %s485 = scalar_select %p484, %s32, 1
          %p486 = scmp.lt.s32.totalorder %s33, 0
          %s487 = scalar_select %p486, %s33, 0
          %s488 = sadd.s32 %s487, %s485
          %s489 = smul.addr %s488, 8
          %s490 = scalar_lea.vmem %s1, %s489
        $region80: #{tpu_custom_call.1} parent=75 // pred_fallthru
          _
      $region76: #{tpu_custom_call.1} parent=5 // pred_fallthru
        _
      %p491 = scmp.le.s32.totalorder 1, %s25
      %p492 = scmp.lt.s32.totalorder %s25, 3
      %p493 = pnand %p491, %p492
      %p494 = pneg %p493
      // Predicated region
      $region81: #{tpu_custom_call.1} parent=5 // pred_check
        _
      $region82: #{tpu_custom_call.1} parent=5 // pred_check_branch
        %496 = sbr.rel (%p493) target = $region84
      $region83: #{tpu_custom_call.1} parent=5 // pred_region
        %s497 = ssub.s32 %s25, 1
        %p498 = scmp.lt.s32.totalorder %s34, 1
        %s499 = scalar_select %p498, %s34, 1
        %s500 = smul.addr %s499, 8
        %s501 = scalar_lea.vmem %s0, %s500
        %p502 = pneg %p63
        %p503 = pneg %p60
        %p504 = scmp.lt.s32.totalorder %s34, 1
        %s505 = scalar_select %p504, %s34, 1
        %p506 = scmp.lt.s32.totalorder %s35, 0
        %s507 = scalar_select %p506, %s35, 0
        %s508 = sadd.s32 %s507, %s505
        %s509 = smul.addr %s508, 8
        %s510 = scalar_lea.vmem %s1, %s509
        %p511 = pneg %p91
        %p512 = pneg %p88
        %p513 = pneg %p112
        %p514 = pneg %p109
        %p515 = pneg %p133
        %p516 = pneg %p130
        %p517 = pneg %p154
        %p518 = pneg %p151
        %p519 = pneg %p175
        %p520 = pneg %p172
        %p521 = pneg %p196
        %p522 = pneg %p193
        %p523 = pneg %p217
        %p524 = pneg %p214
        %p525 = pneg %p238
        %p526 = pneg %p235
        %p527 = pneg %p259
        %p528 = pneg %p256
        %p529 = pneg %p280
        %p530 = pneg %p277
        %p531 = pneg %p301
        %p532 = pneg %p298
        %p533 = pneg %p322
        %p534 = pneg %p319
        %p535 = pneg %p343
        %p536 = pneg %p340
        %p537 = pneg %p364
        %p538 = pneg %p361
        %p539 = pneg %p385
        %p540 = pneg %p382
        %p541 = pneg %p413
        %p542 = pneg %p410
        %s543 = sand.u32 %s400, 1
        %s544 = scalar_lea.sflag [#allocation5], %s543
        %s545 = sand.u32 %s400, 1
        %s546 = smul.addr %s545, 8
        %s547 = scalar_lea.vmem [#allocation4], %s546
        %p548 = scmp.lt.s32.totalorder %s34, 1
        %s549 = scalar_select %p548, %s34, 1
        %s550 = smul.addr %s549, 8
        %s551 = scalar_lea.vmem %s0, %s550
        %p552 = scmp.lt.s32.totalorder %s34, 1
        %s553 = scalar_select %p552, %s34, 1
        %p554 = scmp.lt.s32.totalorder %s35, 0
        %s555 = scalar_select %p554, %s35, 0
        %s556 = sadd.s32 %s555, %s553
        %s557 = smul.addr %s556, 8
        %s558 = scalar_lea.vmem %s1, %s557
        %p559 = scmp.eq.s32.totalorder %s35, 0
        // Predicated region
        $region85: #{tpu_custom_call.1} parent=83 // pred_check
          %p560 = pneg %p559
        $region86: #{tpu_custom_call.1} parent=83 // pred_check_branch
          %562 = sbr.rel (%p560) target = $region88
        $region87: #{tpu_custom_call.1} parent=83 // pred_region
          %v563 = vld [vmem:[%s551] sm:$0xff]
          %v564 = vld [vmem:[%s4] sm:$0xff]
          %v565 = vld [vmem:[%s4 + $0x8] sm:$0xff]
          %v566 = vld [vmem:[%s4 + $0x10] sm:$0xff]
          %v567 = vld [vmem:[%s4 + $0x18] sm:$0xff]
          %v568 = vld [vmem:[%s5] sm:$0x1]
          %v570 = vlaneseq
          %v571 = vshrl.u32 %v570, 7
          %v572 = vsub.s32 0, %v571
          %v573 = vrot.slane %v568, %v572
          %vm575 = vcmask 261120
          %v577 = vsel %vm575, %v563, 0
          %579 = vmatprep.subr.mxu0 0.0
          %580 = vmatpush1.msra.mxu0 %v564
          %581 = vmatprep.subr.mxu0 0.0
          %582 = vmatpush1.msra.mxu0 %v565
          %583 = vmatprep.subr.mxu0 0.0
          %584 = vmatpush1.msra.mxu0 %v566
          %585 = vmatprep.subr.mxu0 0.0
          %586 = vmatpush1.msra.mxu0 %v567
          %587 = vmatprep.subr.mxu0 0.0
          %588 = vmatpush1.msra.mxu0 0.0
          %589 = vmatprep.subr.mxu0 0.0
          %590 = vmatpush1.msra.mxu0 0.0
          %591 = vmatprep.subr.mxu0 0.0
          %592 = vmatpush1.msra.mxu0 0.0
          %593 = vmatprep.subr.mxu0 0.0
          %594 = vmatpush1.msra.mxu0 0.0
          %595 = vmatprep.subr.mxu0 0.0
          %596 = vmatpush1.msra.mxu0 0.0
          %597 = vmatprep.subr.mxu0 0.0
          %598 = vmatpush1.msra.mxu0 0.0
          %599 = vmatprep.subr.mxu0 0.0
          %600 = vmatpush1.msra.mxu0 0.0
          %601 = vmatprep.subr.mxu0 0.0
          %602 = vmatpush1.msra.mxu0 0.0
          %603 = vmatprep.subr.mxu0 0.0
          %604 = vmatpush1.msra.mxu0 0.0
          %605 = vmatprep.subr.mxu0 0.0
          %606 = vmatpush1.msra.mxu0 0.0
          %607 = vmatprep.subr.mxu0 0.0
          %608 = vmatpush1.msra.mxu0 0.0
          %609 = vmatprep.subr.mxu0 0.0
          %610 = vmatpush1.msra.mxu0 0.0
          %611 = vmatprep.subr.mxu0 0.0
          %612 = vmatpush1.msra.mxu0 0.0
          %613 = vmatprep.subr.mxu0 0.0
          %614 = vmatpush1.msra.mxu0 0.0
          %615 = vmatprep.subr.mxu0 0.0
          %616 = vmatpush1.msra.mxu0 0.0
          %617 = vmatprep.subr.mxu0 0.0
          %618 = vmatpush1.msra.mxu0 0.0
          %619 = vmatprep.subr.mxu0 0.0
          %620 = vmatpush1.msra.mxu0 0.0
          %621 = vmatprep.subr.mxu0 0.0
          %622 = vmatpush1.msra.mxu0 0.0
          %623 = vmatprep.subr.mxu0 0.0
          %624 = vmatpush1.msra.mxu0 0.0
          %625 = vmatprep.subr.mxu0 0.0
          %626 = vmatpush1.msra.mxu0 0.0
          %627 = vmatprep.subr.mxu0 0.0
          %628 = vmatpush1.msra.mxu0 0.0
          %629 = vmatprep.subr.mxu0 0.0
          %630 = vmatpush1.msra.mxu0 0.0
          %631 = vmatprep.subr.mxu0 0.0
          %632 = vmatpush1.msra.mxu0 0.0
          %633 = vmatprep.subr.mxu0 0.0
          %634 = vmatpush1.msra.mxu0 0.0
          %635 = vmatprep.subr.mxu0 0.0
          %636 = vmatpush1.msra.mxu0 0.0
          %637 = vmatprep.subr.mxu0 0.0
          %638 = vmatpush1.msra.mxu0 0.0
          %639 = vmatprep.subr.mxu0 0.0
          %640 = vmatpush1.msra.mxu0 0.0
          %641 = vmatprep.subr.mxu0 0.0
          %642 = vmatpush1.msra.mxu0 0.0
          %643 = vmatprep.mubr.f32.mxu0 0.0
          %644 = vmatmul.mubr.f32.gmra.mrb[0].mxu0 %v577
          %v645 = vpop.f32.mrb[0].mxu0
          %v646 = vadd.f32 %v573, %v645
          %v647 = vpop.f32.mrb[0].mxu0
          %648 = vdwg.mxu0
          %vm649 = vcmask 523264
          %650 = vst.msk [vmem:[#allocation2] sm:$0xff] %vm649, %v646
        $region88: #{tpu_custom_call.1} parent=83 // pred_fallthru
          _
        %s651 = smul.u32 %s35, 8
        %s652 = scalar_lea.vmem %s551, %s651
        %v653 = vld [vmem:[%s652] sm:$0xff]
        %v654 = vld [vmem:[%s558] sm:$0xff]
        %vm655 = vcmp.gt.f32.partialorder %v654, 0.0
        %v656 = vsel %vm655, 0.0, -1e+09
        %v657 = vld [vmem:[%s2] sm:$0xff]
        %v658 = vld [vmem:[%s2 + $0x8] sm:$0xff]
        %v659 = vld [vmem:[%s2 + $0x10] sm:$0xff]
        %v660 = vld [vmem:[%s2 + $0x18] sm:$0xff]
        %v661 = vld [vmem:[%s3] sm:$0x1]
        %v663 = vlaneseq
        %v664 = vshrl.u32 %v663, 7
        %v665 = vsub.s32 0, %v664
        %v666 = vrot.slane %v661, %v665
        %vm668 = vcmask 261120
        %v670 = vsel %vm668, %v653, 0
        %672 = vmatprep.subr.mxu0 0.0
        %673 = vmatpush1.msra.mxu0 %v657
        %674 = vmatprep.subr.mxu0 0.0
        %675 = vmatpush1.msra.mxu0 %v658
        %676 = vmatprep.subr.mxu0 0.0
        %677 = vmatpush1.msra.mxu0 %v659
        %678 = vmatprep.subr.mxu0 0.0
        %679 = vmatpush1.msra.mxu0 %v660
        %680 = vmatprep.subr.mxu0 0.0
        %681 = vmatpush1.msra.mxu0 0.0
        %682 = vmatprep.subr.mxu0 0.0
        %683 = vmatpush1.msra.mxu0 0.0
        %684 = vmatprep.subr.mxu0 0.0
        %685 = vmatpush1.msra.mxu0 0.0
        %686 = vmatprep.subr.mxu0 0.0
        %687 = vmatpush1.msra.mxu0 0.0
        %688 = vmatprep.subr.mxu0 0.0
        %689 = vmatpush1.msra.mxu0 0.0
        %690 = vmatprep.subr.mxu0 0.0
        %691 = vmatpush1.msra.mxu0 0.0
        %692 = vmatprep.subr.mxu0 0.0
        %693 = vmatpush1.msra.mxu0 0.0
        %694 = vmatprep.subr.mxu0 0.0
        %695 = vmatpush1.msra.mxu0 0.0
        %696 = vmatprep.subr.mxu0 0.0
        %697 = vmatpush1.msra.mxu0 0.0
        %698 = vmatprep.subr.mxu0 0.0
        %699 = vmatpush1.msra.mxu0 0.0
        %700 = vmatprep.subr.mxu0 0.0
        %701 = vmatpush1.msra.mxu0 0.0
        %702 = vmatprep.subr.mxu0 0.0
        %703 = vmatpush1.msra.mxu0 0.0
        %704 = vmatprep.subr.mxu0 0.0
        %705 = vmatpush1.msra.mxu0 0.0
        %706 = vmatprep.subr.mxu0 0.0
        %707 = vmatpush1.msra.mxu0 0.0
        %708 = vmatprep.subr.mxu0 0.0
        %709 = vmatpush1.msra.mxu0 0.0
        %710 = vmatprep.subr.mxu0 0.0
        %711 = vmatpush1.msra.mxu0 0.0
        %712 = vmatprep.subr.mxu0 0.0
        %713 = vmatpush1.msra.mxu0 0.0
        %714 = vmatprep.subr.mxu0 0.0
        %715 = vmatpush1.msra.mxu0 0.0
        %716 = vmatprep.subr.mxu0 0.0
        %717 = vmatpush1.msra.mxu0 0.0
        %718 = vmatprep.subr.mxu0 0.0
        %719 = vmatpush1.msra.mxu0 0.0
        %720 = vmatprep.subr.mxu0 0.0
        %721 = vmatpush1.msra.mxu0 0.0
        %722 = vmatprep.subr.mxu0 0.0
        %723 = vmatpush1.msra.mxu0 0.0
        %724 = vmatprep.subr.mxu0 0.0
        %725 = vmatpush1.msra.mxu0 0.0
        %726 = vmatprep.subr.mxu0 0.0
        %727 = vmatpush1.msra.mxu0 0.0
        %728 = vmatprep.subr.mxu0 0.0
        %729 = vmatpush1.msra.mxu0 0.0
        %730 = vmatprep.subr.mxu0 0.0
        %731 = vmatpush1.msra.mxu0 0.0
        %732 = vmatprep.subr.mxu0 0.0
        %733 = vmatpush1.msra.mxu0 0.0
        %734 = vmatprep.subr.mxu0 0.0
        %735 = vmatpush1.msra.mxu0 0.0
        %736 = vmatprep.mubr.f32.mxu0 0.0
        %737 = vmatmul.mubr.f32.gmra.mrb[0].mxu0 %v670
        %v738 = vpop.f32.mrb[0].mxu0
        %v739 = vadd.f32 %v666, %v738
        %v740 = vpop.f32.mrb[0].mxu0
        %741 = vdwg.mxu0
        %v742 = vld [vmem:[#allocation2] sm:$0xff]
        %vm743 = vcmask 64512
        %v745 = vsel %vm743, %v739, 0
        %v748 = vsel %vm743, %v742, 0
        %750 = vmatprep.subr.mxu0 0.0
        %751 = vmatpush1.xpose.msra.mxu0 %v748
        %752 = vmatprep.subr.mxu0 0.0
        %753 = vmatpush1.xpose.msra.mxu0 0.0
        %754 = vmatprep.subr.mxu0 0.0
        %755 = vmatpush1.xpose.msra.mxu0 0.0
        %756 = vmatprep.subr.mxu0 0.0
        %757 = vmatpush1.xpose.msra.mxu0 0.0
        %758 = vmatprep.subr.mxu0 0.0
        %759 = vmatpush1.xpose.msra.mxu0 0.0
        %760 = vmatprep.subr.mxu0 0.0
        %761 = vmatpush1.xpose.msra.mxu0 0.0
        %762 = vmatprep.subr.mxu0 0.0
        %763 = vmatpush1.xpose.msra.mxu0 0.0
        %764 = vmatprep.subr.mxu0 0.0
        %765 = vmatpush1.xpose.msra.mxu0 0.0
        %766 = vmatprep.subr.mxu0 0.0
        %767 = vmatpush1.xpose.msra.mxu0 0.0
        %768 = vmatprep.subr.mxu0 0.0
        %769 = vmatpush1.xpose.msra.mxu0 0.0
        %770 = vmatprep.subr.mxu0 0.0
        %771 = vmatpush1.xpose.msra.mxu0 0.0
        %772 = vmatprep.subr.mxu0 0.0
        %773 = vmatpush1.xpose.msra.mxu0 0.0
        %774 = vmatprep.subr.mxu0 0.0
        %775 = vmatpush1.xpose.msra.mxu0 0.0
        %776 = vmatprep.subr.mxu0 0.0
        %777 = vmatpush1.xpose.msra.mxu0 0.0
        %778 = vmatprep.subr.mxu0 0.0
        %779 = vmatpush1.xpose.msra.mxu0 0.0
        %780 = vmatprep.subr.mxu0 0.0
        %781 = vmatpush1.xpose.msra.mxu0 0.0
        %782 = vmatprep.subr.mxu0 0.0
        %783 = vmatpush1.xpose.msra.mxu0 0.0
        %784 = vmatprep.subr.mxu0 0.0
        %785 = vmatpush1.xpose.msra.mxu0 0.0
        %786 = vmatprep.subr.mxu0 0.0
        %787 = vmatpush1.xpose.msra.mxu0 0.0
        %788 = vmatprep.subr.mxu0 0.0
        %789 = vmatpush1.xpose.msra.mxu0 0.0
        %790 = vmatprep.subr.mxu0 0.0
        %791 = vmatpush1.xpose.msra.mxu0 0.0
        %792 = vmatprep.subr.mxu0 0.0
        %793 = vmatpush1.xpose.msra.mxu0 0.0
        %794 = vmatprep.subr.mxu0 0.0
        %795 = vmatpush1.xpose.msra.mxu0 0.0
        %796 = vmatprep.subr.mxu0 0.0
        %797 = vmatpush1.xpose.msra.mxu0 0.0
        %798 = vmatprep.subr.mxu0 0.0
        %799 = vmatpush1.xpose.msra.mxu0 0.0
        %800 = vmatprep.subr.mxu0 0.0
        %801 = vmatpush1.xpose.msra.mxu0 0.0
        %802 = vmatprep.subr.mxu0 0.0
        %803 = vmatpush1.xpose.msra.mxu0 0.0
        %804 = vmatprep.subr.mxu0 0.0
        %805 = vmatpush1.xpose.msra.mxu0 0.0
        %806 = vmatprep.subr.mxu0 0.0
        %807 = vmatpush1.xpose.msra.mxu0 0.0
        %808 = vmatprep.subr.mxu0 0.0
        %809 = vmatpush1.xpose.msra.mxu0 0.0
        %810 = vmatprep.subr.mxu0 0.0
        %811 = vmatpush1.xpose.msra.mxu0 0.0
        %812 = vmatprep.subr.mxu0 0.0
        %813 = vmatpush1.xpose.msra.mxu0 0.0
        %814 = vmatprep.mubr.f32.mxu0 0.0
        %815 = vmatmul.mubr.f32.gmra.mrb[0].mxu0 %v745
        %v816 = vpop.f32.mrb[0].mxu0
        %v817 = vadd.f32 0.0, %v816
        %v818 = vpop.f32.mrb[0].mxu0
        %819 = vdwg.mxu0
        %v820 = vmul.f32 %v817, 0.35355338
        %v821 = vadd.f32 %v820, %v656
        %v822 = vsel %vm743, %v821, -inf
        %823 = vmax.xlane.f32.xlu0 %v822
        %v824 = vpop.xlane.xlu0 %823
        %v825 = vsub.f32 %v821, %v824
        %v826 = vmul.f32 %v825, 1.442695
        %v827 = vpow.pop %v826
        %v828 = vsel %vm743, %v827, 0.0
        %829 = vadd.xlane.f32.xlu0 %v828
        %v830 = vpop.xlane.xlu0 %829
        %v831 = vrcp.pop %v830
        %v832 = vmul.f32 %v827, %v831
        %833 = vrot.lane.b32.xlu0 %v742, 96
        %v834 = vpop.permute.xlu0 %833
        %v837 = vsel %vm743, %v832, 0
        %839 = vmatprep.subr.mxu0 0.0
        %840 = vmatpush1.msra.mxu0 %v834
        %841 = vmatprep.subr.mxu0 0.0
        %842 = vmatpush1.msra.mxu0 0.0
        %843 = vmatprep.subr.mxu0 0.0
        %844 = vmatpush1.msra.mxu0 0.0
        %845 = vmatprep.subr.mxu0 0.0
        %846 = vmatpush1.msra.mxu0 0.0
        %847 = vmatprep.subr.mxu0 0.0
        %848 = vmatpush1.msra.mxu0 0.0
        %849 = vmatprep.subr.mxu0 0.0
        %850 = vmatpush1.msra.mxu0 0.0
        %851 = vmatprep.subr.mxu0 0.0
        %852 = vmatpush1.msra.mxu0 0.0
        %853 = vmatprep.subr.mxu0 0.0
        %854 = vmatpush1.msra.mxu0 0.0
        %855 = vmatprep.subr.mxu0 0.0
        %856 = vmatpush1.msra.mxu0 0.0
        %857 = vmatprep.subr.mxu0 0.0
        %858 = vmatpush1.msra.mxu0 0.0
        %859 = vmatprep.subr.mxu0 0.0
        %860 = vmatpush1.msra.mxu0 0.0
        %861 = vmatprep.subr.mxu0 0.0
        %862 = vmatpush1.msra.mxu0 0.0
        %863 = vmatprep.subr.mxu0 0.0
        %864 = vmatpush1.msra.mxu0 0.0
        %865 = vmatprep.subr.mxu0 0.0
        %866 = vmatpush1.msra.mxu0 0.0
        %867 = vmatprep.subr.mxu0 0.0
        %868 = vmatpush1.msra.mxu0 0.0
        %869 = vmatprep.subr.mxu0 0.0
        %870 = vmatpush1.msra.mxu0 0.0
        %871 = vmatprep.subr.mxu0 0.0
        %872 = vmatpush1.msra.mxu0 0.0
        %873 = vmatprep.subr.mxu0 0.0
        %874 = vmatpush1.msra.mxu0 0.0
        %875 = vmatprep.subr.mxu0 0.0
        %876 = vmatpush1.msra.mxu0 0.0
        %877 = vmatprep.subr.mxu0 0.0
        %878 = vmatpush1.msra.mxu0 0.0
        %879 = vmatprep.subr.mxu0 0.0
        %880 = vmatpush1.msra.mxu0 0.0
        %881 = vmatprep.subr.mxu0 0.0
        %882 = vmatpush1.msra.mxu0 0.0
        %883 = vmatprep.subr.mxu0 0.0
        %884 = vmatpush1.msra.mxu0 0.0
        %885 = vmatprep.subr.mxu0 0.0
        %886 = vmatpush1.msra.mxu0 0.0
        %887 = vmatprep.subr.mxu0 0.0
        %888 = vmatpush1.msra.mxu0 0.0
        %889 = vmatprep.subr.mxu0 0.0
        %890 = vmatpush1.msra.mxu0 0.0
        %891 = vmatprep.subr.mxu0 0.0
        %892 = vmatpush1.msra.mxu0 0.0
        %893 = vmatprep.subr.mxu0 0.0
        %894 = vmatpush1.msra.mxu0 0.0
        %895 = vmatprep.subr.mxu0 0.0
        %896 = vmatpush1.msra.mxu0 0.0
        %897 = vmatprep.subr.mxu0 0.0
        %898 = vmatpush1.msra.mxu0 0.0
        %899 = vmatprep.subr.mxu0 0.0
        %900 = vmatpush1.msra.mxu0 0.0
        %901 = vmatprep.subr.mxu0 0.0
        %902 = vmatpush1.msra.mxu0 0.0
        %903 = vmatprep.mubr.f32.mxu0 0.0
        %904 = vmatmul.mubr.f32.gmra.mrb[0].mxu0 %v837
        %v905 = vpop.f32.mrb[0].mxu0
        %v906 = vadd.f32 0.0, %v905
        %v907 = vpop.f32.mrb[0].mxu0
        %908 = vdwg.mxu0
        %909 = vst.msk [vmem:[#allocation3] sm:$0xff] %vm743, %v906
        %910 = vrot.lane.b32.xlu0 %v739, 120
        %v911 = vpop.permute.xlu0 %910
        %912 = vrot.lane.b32.xlu0 %v742, 120
        %v913 = vpop.permute.xlu0 %912
        %v914 = vsel %vm743, %v911, 0
        %v916 = vsel %vm743, %v913, 0
        %918 = vmatprep.subr.mxu0 0.0
        %919 = vmatpush1.xpose.msra.mxu0 %v916
        %920 = vmatprep.subr.mxu0 0.0
        %921 = vmatpush1.xpose.msra.mxu0 0.0
        %922 = vmatprep.subr.mxu0 0.0
        %923 = vmatpush1.xpose.msra.mxu0 0.0
        %924 = vmatprep.subr.mxu0 0.0
        %925 = vmatpush1.xpose.msra.mxu0 0.0
        %926 = vmatprep.subr.mxu0 0.0
        %927 = vmatpush1.xpose.msra.mxu0 0.0
        %928 = vmatprep.subr.mxu0 0.0
        %929 = vmatpush1.xpose.msra.mxu0 0.0
        %930 = vmatprep.subr.mxu0 0.0
        %931 = vmatpush1.xpose.msra.mxu0 0.0
        %932 = vmatprep.subr.mxu0 0.0
        %933 = vmatpush1.xpose.msra.mxu0 0.0
        %934 = vmatprep.subr.mxu0 0.0
        %935 = vmatpush1.xpose.msra.mxu0 0.0
        %936 = vmatprep.subr.mxu0 0.0
        %937 = vmatpush1.xpose.msra.mxu0 0.0
        %938 = vmatprep.subr.mxu0 0.0
        %939 = vmatpush1.xpose.msra.mxu0 0.0
        %940 = vmatprep.subr.mxu0 0.0
        %941 = vmatpush1.xpose.msra.mxu0 0.0
        %942 = vmatprep.subr.mxu0 0.0
        %943 = vmatpush1.xpose.msra.mxu0 0.0
        %944 = vmatprep.subr.mxu0 0.0
        %945 = vmatpush1.xpose.msra.mxu0 0.0
        %946 = vmatprep.subr.mxu0 0.0
        %947 = vmatpush1.xpose.msra.mxu0 0.0
        %948 = vmatprep.subr.mxu0 0.0
        %949 = vmatpush1.xpose.msra.mxu0 0.0
        %950 = vmatprep.subr.mxu0 0.0
        %951 = vmatpush1.xpose.msra.mxu0 0.0
        %952 = vmatprep.subr.mxu0 0.0
        %953 = vmatpush1.xpose.msra.mxu0 0.0
        %954 = vmatprep.subr.mxu0 0.0
        %955 = vmatpush1.xpose.msra.mxu0 0.0
        %956 = vmatprep.subr.mxu0 0.0
        %957 = vmatpush1.xpose.msra.mxu0 0.0
        %958 = vmatprep.subr.mxu0 0.0
        %959 = vmatpush1.xpose.msra.mxu0 0.0
        %960 = vmatprep.subr.mxu0 0.0
        %961 = vmatpush1.xpose.msra.mxu0 0.0
        %962 = vmatprep.subr.mxu0 0.0
        %963 = vmatpush1.xpose.msra.mxu0 0.0
        %964 = vmatprep.subr.mxu0 0.0
        %965 = vmatpush1.xpose.msra.mxu0 0.0
        %966 = vmatprep.subr.mxu0 0.0
        %967 = vmatpush1.xpose.msra.mxu0 0.0
        %968 = vmatprep.subr.mxu0 0.0
        %969 = vmatpush1.xpose.msra.mxu0 0.0
        %970 = vmatprep.subr.mxu0 0.0
        %971 = vmatpush1.xpose.msra.mxu0 0.0
        %972 = vmatprep.subr.mxu0 0.0
        %973 = vmatpush1.xpose.msra.mxu0 0.0
        %974 = vmatprep.subr.mxu0 0.0
        %975 = vmatpush1.xpose.msra.mxu0 0.0
        %976 = vmatprep.subr.mxu0 0.0
        %977 = vmatpush1.xpose.msra.mxu0 0.0
        %978 = vmatprep.subr.mxu0 0.0
        %979 = vmatpush1.xpose.msra.mxu0 0.0
        %980 = vmatprep.subr.mxu0 0.0
        %981 = vmatpush1.xpose.msra.mxu0 0.0
        %982 = vmatprep.mubr.f32.mxu0 0.0
        %983 = vmatmul.mubr.f32.gmra.mrb[0].mxu0 %v914
        %v984 = vpop.f32.mrb[0].mxu0
        %v985 = vadd.f32 0.0, %v984
        %v986 = vpop.f32.mrb[0].mxu0
        %987 = vdwg.mxu0
        %v988 = vmul.f32 %v985, 0.35355338
        %v989 = vadd.f32 %v988, %v656
        %v990 = vsel %vm743, %v989, -inf
        %991 = vmax.xlane.f32.xlu0 %v990
        %v992 = vpop.xlane.xlu0 %991
        %v993 = vsub.f32 %v989, %v992
        %v994 = vmul.f32 %v993, 1.442695
        %v995 = vpow.pop %v994
        %v996 = vsel %vm743, %v995, 0.0
        %997 = vadd.xlane.f32.xlu0 %v996
        %v998 = vpop.xlane.xlu0 %997
        %v999 = vrcp.pop %v998
        %v1000 = vmul.f32 %v995, %v999
        %1001 = vrot.lane.b32.xlu0 %v742, 88
        %v1002 = vpop.permute.xlu0 %1001
        %v1005 = vsel %vm743, %v1000, 0
        %1007 = vmatprep.subr.mxu0 0.0
        %1008 = vmatpush1.msra.mxu0 %v1002
        %1009 = vmatprep.subr.mxu0 0.0
        %1010 = vmatpush1.msra.mxu0 0.0
        %1011 = vmatprep.subr.mxu0 0.0
        %1012 = vmatpush1.msra.mxu0 0.0
        %1013 = vmatprep.subr.mxu0 0.0
        %1014 = vmatpush1.msra.mxu0 0.0
        %1015 = vmatprep.subr.mxu0 0.0
        %1016 = vmatpush1.msra.mxu0 0.0
        %1017 = vmatprep.subr.mxu0 0.0
        %1018 = vmatpush1.msra.mxu0 0.0
        %1019 = vmatprep.subr.mxu0 0.0
        %1020 = vmatpush1.msra.mxu0 0.0
        %1021 = vmatprep.subr.mxu0 0.0
        %1022 = vmatpush1.msra.mxu0 0.0
        %1023 = vmatprep.subr.mxu0 0.0
        %1024 = vmatpush1.msra.mxu0 0.0
        %1025 = vmatprep.subr.mxu0 0.0
        %1026 = vmatpush1.msra.mxu0 0.0
        %1027 = vmatprep.subr.mxu0 0.0
        %1028 = vmatpush1.msra.mxu0 0.0
        %1029 = vmatprep.subr.mxu0 0.0
        %1030 = vmatpush1.msra.mxu0 0.0
        %1031 = vmatprep.subr.mxu0 0.0
        %1032 = vmatpush1.msra.mxu0 0.0
        %1033 = vmatprep.subr.mxu0 0.0
        %1034 = vmatpush1.msra.mxu0 0.0
        %1035 = vmatprep.subr.mxu0 0.0
        %1036 = vmatpush1.msra.mxu0 0.0
        %1037 = vmatprep.subr.mxu0 0.0
        %1038 = vmatpush1.msra.mxu0 0.0
        %1039 = vmatprep.subr.mxu0 0.0
        %1040 = vmatpush1.msra.mxu0 0.0
        %1041 = vmatprep.subr.mxu0 0.0
        %1042 = vmatpush1.msra.mxu0 0.0
        %1043 = vmatprep.subr.mxu0 0.0
        %1044 = vmatpush1.msra.mxu0 0.0
        %1045 = vmatprep.subr.mxu0 0.0
        %1046 = vmatpush1.msra.mxu0 0.0
        %1047 = vmatprep.subr.mxu0 0.0
        %1048 = vmatpush1.msra.mxu0 0.0
        %1049 = vmatprep.subr.mxu0 0.0
        %1050 = vmatpush1.msra.mxu0 0.0
        %1051 = vmatprep.subr.mxu0 0.0
        %1052 = vmatpush1.msra.mxu0 0.0
        %1053 = vmatprep.subr.mxu0 0.0
        %1054 = vmatpush1.msra.mxu0 0.0
        %1055 = vmatprep.subr.mxu0 0.0
        %1056 = vmatpush1.msra.mxu0 0.0
        %1057 = vmatprep.subr.mxu0 0.0
        %1058 = vmatpush1.msra.mxu0 0.0
        %1059 = vmatprep.subr.mxu0 0.0
        %1060 = vmatpush1.msra.mxu0 0.0
        %1061 = vmatprep.subr.mxu0 0.0
        %1062 = vmatpush1.msra.mxu0 0.0
        %1063 = vmatprep.subr.mxu0 0.0
        %1064 = vmatpush1.msra.mxu0 0.0
        %1065 = vmatprep.subr.mxu0 0.0
        %1066 = vmatpush1.msra.mxu0 0.0
        %1067 = vmatprep.subr.mxu0 0.0
        %1068 = vmatpush1.msra.mxu0 0.0
        %1069 = vmatprep.subr.mxu0 0.0
        %1070 = vmatpush1.msra.mxu0 0.0
        %1071 = vmatprep.mubr.f32.mxu0 0.0
        %1072 = vmatmul.mubr.f32.gmra.mrb[0].mxu0 %v1005
        %v1073 = vpop.f32.mrb[0].mxu0
        %v1074 = vadd.f32 0.0, %v1073
        %v1075 = vpop.f32.mrb[0].mxu0
        %1076 = vdwg.mxu0
        %1078 = vrot.lane.b32.xlu0 %v1074, 8
        %v1079 = vpop.permute.xlu0 %1078
        %vm1081 = vcmask 130112
        %1082 = vst.msk [vmem:[#allocation3] sm:$0xff] %vm1081, %v1079
        %1083 = vrot.lane.b32.xlu0 %v739, 112
        %v1084 = vpop.permute.xlu0 %1083
        %1085 = vrot.lane.b32.xlu0 %v742, 112
        %v1086 = vpop.permute.xlu0 %1085
        %v1087 = vsel %vm743, %v1084, 0
        %v1089 = vsel %vm743, %v1086, 0
        %1091 = vmatprep.subr.mxu0 0.0
        %1092 = vmatpush1.xpose.msra.mxu0 %v1089
        %1093 = vmatprep.subr.mxu0 0.0
        %1094 = vmatpush1.xpose.msra.mxu0 0.0
        %1095 = vmatprep.subr.mxu0 0.0
        %1096 = vmatpush1.xpose.msra.mxu0 0.0
        %1097 = vmatprep.subr.mxu0 0.0
        %1098 = vmatpush1.xpose.msra.mxu0 0.0
        %1099 = vmatprep.subr.mxu0 0.0
        %1100 = vmatpush1.xpose.msra.mxu0 0.0
        %1101 = vmatprep.subr.mxu0 0.0
        %1102 = vmatpush1.xpose.msra.mxu0 0.0
        %1103 = vmatprep.subr.mxu0 0.0
        %1104 = vmatpush1.xpose.msra.mxu0 0.0
        %1105 = vmatprep.subr.mxu0 0.0
        %1106 = vmatpush1.xpose.msra.mxu0 0.0
        %1107 = vmatprep.subr.mxu0 0.0
        %1108 = vmatpush1.xpose.msra.mxu0 0.0
        %1109 = vmatprep.subr.mxu0 0.0
        %1110 = vmatpush1.xpose.msra.mxu0 0.0
        %1111 = vmatprep.subr.mxu0 0.0
        %1112 = vmatpush1.xpose.msra.mxu0 0.0
        %1113 = vmatprep.subr.mxu0 0.0
        %1114 = vmatpush1.xpose.msra.mxu0 0.0
        %1115 = vmatprep.subr.mxu0 0.0
        %1116 = vmatpush1.xpose.msra.mxu0 0.0
        %1117 = vmatprep.subr.mxu0 0.0
        %1118 = vmatpush1.xpose.msra.mxu0 0.0
        %1119 = vmatprep.subr.mxu0 0.0
        %1120 = vmatpush1.xpose.msra.mxu0 0.0
        %1121 = vmatprep.subr.mxu0 0.0
        %1122 = vmatpush1.xpose.msra.mxu0 0.0
        %1123 = vmatprep.subr.mxu0 0.0
        %1124 = vmatpush1.xpose.msra.mxu0 0.0
        %1125 = vmatprep.subr.mxu0 0.0
        %1126 = vmatpush1.xpose.msra.mxu0 0.0
        %1127 = vmatprep.subr.mxu0 0.0
        %1128 = vmatpush1.xpose.msra.mxu0 0.0
        %1129 = vmatprep.subr.mxu0 0.0
        %1130 = vmatpush1.xpose.msra.mxu0 0.0
        %1131 = vmatprep.subr.mxu0 0.0
        %1132 = vmatpush1.xpose.msra.mxu0 0.0
        %1133 = vmatprep.subr.mxu0 0.0
        %1134 = vmatpush1.xpose.msra.mxu0 0.0
        %1135 = vmatprep.subr.mxu0 0.0
        %1136 = vmatpush1.xpose.msra.mxu0 0.0
        %1137 = vmatprep.subr.mxu0 0.0
        %1138 = vmatpush1.xpose.msra.mxu0 0.0
        %1139 = vmatprep.subr.mxu0 0.0
        %1140 = vmatpush1.xpose.msra.mxu0 0.0
        %1141 = vmatprep.subr.mxu0 0.0
        %1142 = vmatpush1.xpose.msra.mxu0 0.0
        %1143 = vmatprep.subr.mxu0 0.0
        %1144 = vmatpush1.xpose.msra.mxu0 0.0
        %1145 = vmatprep.subr.mxu0 0.0
        %1146 = vmatpush1.xpose.msra.mxu0 0.0
        %1147 = vmatprep.subr.mxu0 0.0
        %1148 = vmatpush1.xpose.msra.mxu0 0.0
        %1149 = vmatprep.subr.mxu0 0.0
        %1150 = vmatpush1.xpose.msra.mxu0 0.0
        %1151 = vmatprep.subr.mxu0 0.0
        %1152 = vmatpush1.xpose.msra.mxu0 0.0
        %1153 = vmatprep.subr.mxu0 0.0
        %1154 = vmatpush1.xpose.msra.mxu0 0.0
        %1155 = vmatprep.mubr.f32.mxu0 0.0
        %1156 = vmatmul.mubr.f32.gmra.mrb[0].mxu0 %v1087
        %v1157 = vpop.f32.mrb[0].mxu0
        %v1158 = vadd.f32 0.0, %v1157
        %v1159 = vpop.f32.mrb[0].mxu0
        %1160 = vdwg.mxu0
        %v1161 = vmul.f32 %v1158, 0.35355338
        %v1162 = vadd.f32 %v1161, %v656
        %v1163 = vsel %vm743, %v1162, -inf
        %1164 = vmax.xlane.f32.xlu0 %v1163
        %v1165 = vpop.xlane.xlu0 %1164
        %v1166 = vsub.f32 %v1162, %v1165
        %v1167 = vmul.f32 %v1166, 1.442695
        %v1168 = vpow.pop %v1167
        %v1169 = vsel %vm743, %v1168, 0.0
        %1170 = vadd.xlane.f32.xlu0 %v1169
        %v1171 = vpop.xlane.xlu0 %1170
        %v1172 = vrcp.pop %v1171
        %v1173 = vmul.f32 %v1168, %v1172
        %1174 = vrot.lane.b32.xlu0 %v742, 80
        %v1175 = vpop.permute.xlu0 %1174
        %v1178 = vsel %vm743, %v1173, 0
        %1180 = vmatprep.subr.mxu0 0.0
        %1181 = vmatpush1.msra.mxu0 %v1175
        %1182 = vmatprep.subr.mxu0 0.0
        %1183 = vmatpush1.msra.mxu0 0.0
        %1184 = vmatprep.subr.mxu0 0.0
        %1185 = vmatpush1.msra.mxu0 0.0
        %1186 = vmatprep.subr.mxu0 0.0
        %1187 = vmatpush1.msra.mxu0 0.0
        %1188 = vmatprep.subr.mxu0 0.0
        %1189 = vmatpush1.msra.mxu0 0.0
        %1190 = vmatprep.subr.mxu0 0.0
        %1191 = vmatpush1.msra.mxu0 0.0
        %1192 = vmatprep.subr.mxu0 0.0
        %1193 = vmatpush1.msra.mxu0 0.0
        %1194 = vmatprep.subr.mxu0 0.0
        %1195 = vmatpush1.msra.mxu0 0.0
        %1196 = vmatprep.subr.mxu0 0.0
        %1197 = vmatpush1.msra.mxu0 0.0
        %1198 = vmatprep.subr.mxu0 0.0
        %1199 = vmatpush1.msra.mxu0 0.0
        %1200 = vmatprep.subr.mxu0 0.0
        %1201 = vmatpush1.msra.mxu0 0.0
        %1202 = vmatprep.subr.mxu0 0.0
        %1203 = vmatpush1.msra.mxu0 0.0
        %1204 = vmatprep.subr.mxu0 0.0
        %1205 = vmatpush1.msra.mxu0 0.0
        %1206 = vmatprep.subr.mxu0 0.0
        %1207 = vmatpush1.msra.mxu0 0.0
        %1208 = vmatprep.subr.mxu0 0.0
        %1209 = vmatpush1.msra.mxu0 0.0
        %1210 = vmatprep.subr.mxu0 0.0
        %1211 = vmatpush1.msra.mxu0 0.0
        %1212 = vmatprep.subr.mxu0 0.0
        %1213 = vmatpush1.msra.mxu0 0.0
        %1214 = vmatprep.subr.mxu0 0.0
        %1215 = vmatpush1.msra.mxu0 0.0
        %1216 = vmatprep.subr.mxu0 0.0
        %1217 = vmatpush1.msra.mxu0 0.0
        %1218 = vmatprep.subr.mxu0 0.0
        %1219 = vmatpush1.msra.mxu0 0.0
        %1220 = vmatprep.subr.mxu0 0.0
        %1221 = vmatpush1.msra.mxu0 0.0
        %1222 = vmatprep.subr.mxu0 0.0
        %1223 = vmatpush1.msra.mxu0 0.0
        %1224 = vmatprep.subr.mxu0 0.0
        %1225 = vmatpush1.msra.mxu0 0.0
        %1226 = vmatprep.subr.mxu0 0.0
        %1227 = vmatpush1.msra.mxu0 0.0
        %1228 = vmatprep.subr.mxu0 0.0
        %1229 = vmatpush1.msra.mxu0 0.0
        %1230 = vmatprep.subr.mxu0 0.0
        %1231 = vmatpush1.msra.mxu0 0.0
        %1232 = vmatprep.subr.mxu0 0.0
        %1233 = vmatpush1.msra.mxu0 0.0
        %1234 = vmatprep.subr.mxu0 0.0
        %1235 = vmatpush1.msra.mxu0 0.0
        %1236 = vmatprep.subr.mxu0 0.0
        %1237 = vmatpush1.msra.mxu0 0.0
        %1238 = vmatprep.subr.mxu0 0.0
        %1239 = vmatpush1.msra.mxu0 0.0
        %1240 = vmatprep.subr.mxu0 0.0
        %1241 = vmatpush1.msra.mxu0 0.0
        %1242 = vmatprep.subr.mxu0 0.0
        %1243 = vmatpush1.msra.mxu0 0.0
        %1244 = vmatprep.mubr.f32.mxu0 0.0
        %1245 = vmatmul.mubr.f32.gmra.mrb[0].mxu0 %v1178
        %v1246 = vpop.f32.mrb[0].mxu0
        %v1247 = vadd.f32 0.0, %v1246
        %v1248 = vpop.f32.mrb[0].mxu0
        %1249 = vdwg.mxu0
        %1251 = vrot.lane.b32.xlu0 %v1247, 16
        %v1252 = vpop.permute.xlu0 %1251
        %vm1254 = vcmask 195712
        %1255 = vst.msk [vmem:[#allocation3] sm:$0xff] %vm1254, %v1252
        %1256 = vrot.lane.b32.xlu0 %v739, 104
        %v1257 = vpop.permute.xlu0 %1256
        %1258 = vrot.lane.b32.xlu0 %v742, 104
        %v1259 = vpop.permute.xlu0 %1258
        %v1260 = vsel %vm743, %v1257, 0
        %v1262 = vsel %vm743, %v1259, 0
        %1264 = vmatprep.subr.mxu0 0.0
        %1265 = vmatpush1.xpose.msra.mxu0 %v1262
        %1266 = vmatprep.subr.mxu0 0.0
        %1267 = vmatpush1.xpose.msra.mxu0 0.0
        %1268 = vmatprep.subr.mxu0 0.0
        %1269 = vmatpush1.xpose.msra.mxu0 0.0
        %1270 = vmatprep.subr.mxu0 0.0
        %1271 = vmatpush1.xpose.msra.mxu0 0.0
        %1272 = vmatprep.subr.mxu0 0.0
        %1273 = vmatpush1.xpose.msra.mxu0 0.0
        %1274 = vmatprep.subr.mxu0 0.0
        %1275 = vmatpush1.xpose.msra.mxu0 0.0
        %1276 = vmatprep.subr.mxu0 0.0
        %1277 = vmatpush1.xpose.msra.mxu0 0.0
        %1278 = vmatprep.subr.mxu0 0.0
        %1279 = vmatpush1.xpose.msra.mxu0 0.0
        %1280 = vmatprep.subr.mxu0 0.0
        %1281 = vmatpush1.xpose.msra.mxu0 0.0
        %1282 = vmatprep.subr.mxu0 0.0
        %1283 = vmatpush1.xpose.msra.mxu0 0.0
        %1284 = vmatprep.subr.mxu0 0.0
        %1285 = vmatpush1.xpose.msra.mxu0 0.0
        %1286 = vmatprep.subr.mxu0 0.0
        %1287 = vmatpush1.xpose.msra.mxu0 0.0
        %1288 = vmatprep.subr.mxu0 0.0
        %1289 = vmatpush1.xpose.msra.mxu0 0.0
        %1290 = vmatprep.subr.mxu0 0.0
        %1291 = vmatpush1.xpose.msra.mxu0 0.0
        %1292 = vmatprep.subr.mxu0 0.0
        %1293 = vmatpush1.xpose.msra.mxu0 0.0
        %1294 = vmatprep.subr.mxu0 0.0
        %1295 = vmatpush1.xpose.msra.mxu0 0.0
        %1296 = vmatprep.subr.mxu0 0.0
        %1297 = vmatpush1.xpose.msra.mxu0 0.0
        %1298 = vmatprep.subr.mxu0 0.0
        %1299 = vmatpush1.xpose.msra.mxu0 0.0
        %1300 = vmatprep.subr.mxu0 0.0
        %1301 = vmatpush1.xpose.msra.mxu0 0.0
        %1302 = vmatprep.subr.mxu0 0.0
        %1303 = vmatpush1.xpose.msra.mxu0 0.0
        %1304 = vmatprep.subr.mxu0 0.0
        %1305 = vmatpush1.xpose.msra.mxu0 0.0
        %1306 = vmatprep.subr.mxu0 0.0
        %1307 = vmatpush1.xpose.msra.mxu0 0.0
        %1308 = vmatprep.subr.mxu0 0.0
        %1309 = vmatpush1.xpose.msra.mxu0 0.0
        %1310 = vmatprep.subr.mxu0 0.0
        %1311 = vmatpush1.xpose.msra.mxu0 0.0
        %1312 = vmatprep.subr.mxu0 0.0
        %1313 = vmatpush1.xpose.msra.mxu0 0.0
        %1314 = vmatprep.subr.mxu0 0.0
        %1315 = vmatpush1.xpose.msra.mxu0 0.0
        %1316 = vmatprep.subr.mxu0 0.0
        %1317 = vmatpush1.xpose.msra.mxu0 0.0
        %1318 = vmatprep.subr.mxu0 0.0
        %1319 = vmatpush1.xpose.msra.mxu0 0.0
        %1320 = vmatprep.subr.mxu0 0.0
        %1321 = vmatpush1.xpose.msra.mxu0 0.0
        %1322 = vmatprep.subr.mxu0 0.0
        %1323 = vmatpush1.xpose.msra.mxu0 0.0
        %1324 = vmatprep.subr.mxu0 0.0
        %1325 = vmatpush1.xpose.msra.mxu0 0.0
        %1326 = vmatprep.subr.mxu0 0.0
        %1327 = vmatpush1.xpose.msra.mxu0 0.0
        %1328 = vmatprep.mubr.f32.mxu0 0.0
        %1329 = vmatmul.mubr.f32.gmra.mrb[0].mxu0 %v1260
        %v1330 = vpop.f32.mrb[0].mxu0
        %v1331 = vadd.f32 0.0, %v1330
        %v1332 = vpop.f32.mrb[0].mxu0
        %1333 = vdwg.mxu0
        %v1334 = vmul.f32 %v1331, 0.35355338
        %v1335 = vadd.f32 %v1334, %v656
        %v1336 = vsel %vm743, %v1335, -inf
        %1337 = vmax.xlane.f32.xlu0 %v1336
        %v1338 = vpop.xlane.xlu0 %1337
        %v1339 = vsub.f32 %v1335, %v1338
        %v1340 = vmul.f32 %v1339, 1.442695
        %v1341 = vpow.pop %v1340
        %v1342 = vsel %vm743, %v1341, 0.0
        %1343 = vadd.xlane.f32.xlu0 %v1342
        %v1344 = vpop.xlane.xlu0 %1343
        %v1345 = vrcp.pop %v1344
        %v1346 = vmul.f32 %v1341, %v1345
        %1347 = vrot.lane.b32.xlu0 %v742, 72
        %v1348 = vpop.permute.xlu0 %1347
        %v1351 = vsel %vm743, %v1346, 0
        %1353 = vmatprep.subr.mxu0 0.0
        %1354 = vmatpush1.msra.mxu0 %v1348
        %1355 = vmatprep.subr.mxu0 0.0
        %1356 = vmatpush1.msra.mxu0 0.0
        %1357 = vmatprep.subr.mxu0 0.0
        %1358 = vmatpush1.msra.mxu0 0.0
        %1359 = vmatprep.subr.mxu0 0.0
        %1360 = vmatpush1.msra.mxu0 0.0
        %1361 = vmatprep.subr.mxu0 0.0
        %1362 = vmatpush1.msra.mxu0 0.0
        %1363 = vmatprep.subr.mxu0 0.0
        %1364 = vmatpush1.msra.mxu0 0.0
        %1365 = vmatprep.subr.mxu0 0.0
        %1366 = vmatpush1.msra.mxu0 0.0
        %1367 = vmatprep.subr.mxu0 0.0
        %1368 = vmatpush1.msra.mxu0 0.0
        %1369 = vmatprep.subr.mxu0 0.0
        %1370 = vmatpush1.msra.mxu0 0.0
        %1371 = vmatprep.subr.mxu0 0.0
        %1372 = vmatpush1.msra.mxu0 0.0
        %1373 = vmatprep.subr.mxu0 0.0
        %1374 = vmatpush1.msra.mxu0 0.0
        %1375 = vmatprep.subr.mxu0 0.0
        %1376 = vmatpush1.msra.mxu0 0.0
        %1377 = vmatprep.subr.mxu0 0.0
        %1378 = vmatpush1.msra.mxu0 0.0
        %1379 = vmatprep.subr.mxu0 0.0
        %1380 = vmatpush1.msra.mxu0 0.0
        %1381 = vmatprep.subr.mxu0 0.0
        %1382 = vmatpush1.msra.mxu0 0.0
        %1383 = vmatprep.subr.mxu0 0.0
        %1384 = vmatpush1.msra.mxu0 0.0
        %1385 = vmatprep.subr.mxu0 0.0
        %1386 = vmatpush1.msra.mxu0 0.0
        %1387 = vmatprep.subr.mxu0 0.0
        %1388 = vmatpush1.msra.mxu0 0.0
        %1389 = vmatprep.subr.mxu0 0.0
        %1390 = vmatpush1.msra.mxu0 0.0
        %1391 = vmatprep.subr.mxu0 0.0
        %1392 = vmatpush1.msra.mxu0 0.0
        %1393 = vmatprep.subr.mxu0 0.0
        %1394 = vmatpush1.msra.mxu0 0.0
        %1395 = vmatprep.subr.mxu0 0.0
        %1396 = vmatpush1.msra.mxu0 0.0
        %1397 = vmatprep.subr.mxu0 0.0
        %1398 = vmatpush1.msra.mxu0 0.0
        %1399 = vmatprep.subr.mxu0 0.0
        %1400 = vmatpush1.msra.mxu0 0.0
        %1401 = vmatprep.subr.mxu0 0.0
        %1402 = vmatpush1.msra.mxu0 0.0
        %1403 = vmatprep.subr.mxu0 0.0
        %1404 = vmatpush1.msra.mxu0 0.0
        %1405 = vmatprep.subr.mxu0 0.0
        %1406 = vmatpush1.msra.mxu0 0.0
        %1407 = vmatprep.subr.mxu0 0.0
        %1408 = vmatpush1.msra.mxu0 0.0
        %1409 = vmatprep.subr.mxu0 0.0
        %1410 = vmatpush1.msra.mxu0 0.0
        %1411 = vmatprep.subr.mxu0 0.0
        %1412 = vmatpush1.msra.mxu0 0.0
        %1413 = vmatprep.subr.mxu0 0.0
        %1414 = vmatpush1.msra.mxu0 0.0
        %1415 = vmatprep.subr.mxu0 0.0
        %1416 = vmatpush1.msra.mxu0 0.0
        %1417 = vmatprep.mubr.f32.mxu0 0.0
        %1418 = vmatmul.mubr.f32.gmra.mrb[0].mxu0 %v1351
        %v1419 = vpop.f32.mrb[0].mxu0
        %v1420 = vadd.f32 0.0, %v1419
        %v1421 = vpop.f32.mrb[0].mxu0
        %1422 = vdwg.mxu0
        %1424 = vrot.lane.b32.xlu0 %v1420, 24
        %v1425 = vpop.permute.xlu0 %1424
        %vm1427 = vcmask 261312
        %1428 = vst.msk [vmem:[#allocation3] sm:$0xff] %vm1427, %v1425
        %v1429 = vld [vmem:[#allocation3] sm:$0xff]
        %v1430 = vld [vmem:[%s6] sm:$0xff]
        %v1431 = vld [vmem:[%s6 + $0x8] sm:$0xff]
        %v1432 = vld [vmem:[%s6 + $0x10] sm:$0xff]
        %v1433 = vld [vmem:[%s6 + $0x18] sm:$0xff]
        %v1434 = vld [vmem:[%s7] sm:$0x1]
        %v1436 = vlaneseq
        %v1437 = vshrl.u32 %v1436, 7
        %v1438 = vsub.s32 0, %v1437
        %v1439 = vrot.slane %v1434, %v1438
        %v1442 = vsel %vm668, %v1429, 0
        %1444 = vmatprep.subr.mxu0 0.0
        %1445 = vmatpush1.msra.mxu0 %v1430
        %1446 = vmatprep.subr.mxu0 0.0
        %1447 = vmatpush1.msra.mxu0 %v1431
        %1448 = vmatprep.subr.mxu0 0.0
        %1449 = vmatpush1.msra.mxu0 %v1432
        %1450 = vmatprep.subr.mxu0 0.0
        %1451 = vmatpush1.msra.mxu0 %v1433
        %1452 = vmatprep.subr.mxu0 0.0
        %1453 = vmatpush1.msra.mxu0 0.0
        %1454 = vmatprep.subr.mxu0 0.0
        %1455 = vmatpush1.msra.mxu0 0.0
        %1456 = vmatprep.subr.mxu0 0.0
        %1457 = vmatpush1.msra.mxu0 0.0
        %1458 = vmatprep.subr.mxu0 0.0
        %1459 = vmatpush1.msra.mxu0 0.0
        %1460 = vmatprep.subr.mxu0 0.0
        %1461 = vmatpush1.msra.mxu0 0.0
        %1462 = vmatprep.subr.mxu0 0.0
        %1463 = vmatpush1.msra.mxu0 0.0
        %1464 = vmatprep.subr.mxu0 0.0
        %1465 = vmatpush1.msra.mxu0 0.0
        %1466 = vmatprep.subr.mxu0 0.0
        %1467 = vmatpush1.msra.mxu0 0.0
        %1468 = vmatprep.subr.mxu0 0.0
        %1469 = vmatpush1.msra.mxu0 0.0
        %1470 = vmatprep.subr.mxu0 0.0
        %1471 = vmatpush1.msra.mxu0 0.0
        %1472 = vmatprep.subr.mxu0 0.0
        %1473 = vmatpush1.msra.mxu0 0.0
        %1474 = vmatprep.subr.mxu0 0.0
        %1475 = vmatpush1.msra.mxu0 0.0
        %1476 = vmatprep.subr.mxu0 0.0
        %1477 = vmatpush1.msra.mxu0 0.0
        %1478 = vmatprep.subr.mxu0 0.0
        %1479 = vmatpush1.msra.mxu0 0.0
        %1480 = vmatprep.subr.mxu0 0.0
        %1481 = vmatpush1.msra.mxu0 0.0
        %1482 = vmatprep.subr.mxu0 0.0
        %1483 = vmatpush1.msra.mxu0 0.0
        %1484 = vmatprep.subr.mxu0 0.0
        %1485 = vmatpush1.msra.mxu0 0.0
        %1486 = vmatprep.subr.mxu0 0.0
        %1487 = vmatpush1.msra.mxu0 0.0
        %1488 = vmatprep.subr.mxu0 0.0
        %1489 = vmatpush1.msra.mxu0 0.0
        %1490 = vmatprep.subr.mxu0 0.0
        %1491 = vmatpush1.msra.mxu0 0.0
        %1492 = vmatprep.subr.mxu0 0.0
        %1493 = vmatpush1.msra.mxu0 0.0
        %1494 = vmatprep.subr.mxu0 0.0
        %1495 = vmatpush1.msra.mxu0 0.0
        %1496 = vmatprep.subr.mxu0 0.0
        %1497 = vmatpush1.msra.mxu0 0.0
        %1498 = vmatprep.subr.mxu0 0.0
        %1499 = vmatpush1.msra.mxu0 0.0
        %1500 = vmatprep.subr.mxu0 0.0
        %1501 = vmatpush1.msra.mxu0 0.0
        %1502 = vmatprep.subr.mxu0 0.0
        %1503 = vmatpush1.msra.mxu0 0.0
        %1504 = vmatprep.subr.mxu0 0.0
        %1505 = vmatpush1.msra.mxu0 0.0
        %1506 = vmatprep.subr.mxu0 0.0
        %1507 = vmatpush1.msra.mxu0 0.0
        %1508 = vmatprep.mubr.f32.mxu0 0.0
        %1509 = vmatmul.mubr.f32.gmra.mrb[0].mxu0 %v1442
        %v1510 = vpop.f32.mrb[0].mxu0
        %v1511 = vadd.f32 %v1439, %v1510
        %v1512 = vpop.f32.mrb[0].mxu0
        %1513 = vdwg.mxu0
        %v1514 = vadd.f32 %v653, %v1511
        %v1515 = vld [vmem:[%s8] sm:$0x1]
        %v1516 = vld [vmem:[%s9] sm:$0x1]
        %v1517 = vsel %vm668, %v1514, 0.0
        %1518 = vadd.xlane.f32.xlu0 %v1517
        %v1519 = vpop.xlane.xlu0 %1518
        %v1520 = vrcp.pop 32.0
        %v1521 = vmul.f32 %v1519, %v1520
        %v1522 = vsub.f32 %v1514, %v1521
        %v1523 = vmul.f32 %v1522, %v1522
        %v1524 = vsel %vm668, %v1523, 0.0
        %1525 = vadd.xlane.f32.xlu0 %v1524
        %v1526 = vpop.xlane.xlu0 %1525
        %v1527 = vmul.f32 %v1526, %v1520
        %v1528 = vadd.f32 %v1527, 1e-05
        %v1529 = vrsqrt.pop %v1528
        %v1530 = vmul.f32 %v1522, %v1529
        %v1532 = vlaneseq
        %v1533 = vshrl.u32 %v1532, 7
        %v1534 = vsub.s32 0, %v1533
        %v1535 = vrot.slane %v1515, %v1534
        %v1537 = vmul.f32 %v1530, %v1535
        %v1539 = vlaneseq
        %v1540 = vshrl.u32 %v1539, 7
        %v1541 = vsub.s32 0, %v1540
        %v1542 = vrot.slane %v1516, %v1541
        %v1544 = vadd.f32 %v1537, %v1542
        %v1545 = vld [vmem:[%s12] sm:$0xff]
        %v1546 = vld [vmem:[%s12 + $0x8] sm:$0xff]
        %v1547 = vld [vmem:[%s12 + $0x10] sm:$0xff]
        %v1548 = vld [vmem:[%s12 + $0x18] sm:$0xff]
        %v1549 = vld [vmem:[%s13] sm:$0x1]
        %v1551 = vlaneseq
        %v1552 = vshrl.u32 %v1551, 7
        %v1553 = vsub.s32 0, %v1552
        %v1554 = vrot.slane %v1549, %v1553
        %v1557 = vsel %vm668, %v1544, 0
        %1559 = vmatprep.subr.mxu0 0.0
        %1560 = vmatpush1.msra.mxu0 %v1545
        %1561 = vmatprep.subr.mxu0 0.0
        %1562 = vmatpush1.msra.mxu0 %v1546
        %1563 = vmatprep.subr.mxu0 0.0
        %1564 = vmatpush1.msra.mxu0 %v1547
        %1565 = vmatprep.subr.mxu0 0.0
        %1566 = vmatpush1.msra.mxu0 %v1548
        %1567 = vmatprep.subr.mxu0 0.0
        %1568 = vmatpush1.msra.mxu0 0.0
        %1569 = vmatprep.subr.mxu0 0.0
        %1570 = vmatpush1.msra.mxu0 0.0
        %1571 = vmatprep.subr.mxu0 0.0
        %1572 = vmatpush1.msra.mxu0 0.0
        %1573 = vmatprep.subr.mxu0 0.0
        %1574 = vmatpush1.msra.mxu0 0.0
        %1575 = vmatprep.subr.mxu0 0.0
        %1576 = vmatpush1.msra.mxu0 0.0
        %1577 = vmatprep.subr.mxu0 0.0
        %1578 = vmatpush1.msra.mxu0 0.0
        %1579 = vmatprep.subr.mxu0 0.0
        %1580 = vmatpush1.msra.mxu0 0.0
        %1581 = vmatprep.subr.mxu0 0.0
        %1582 = vmatpush1.msra.mxu0 0.0
        %1583 = vmatprep.subr.mxu0 0.0
        %1584 = vmatpush1.msra.mxu0 0.0
        %1585 = vmatprep.subr.mxu0 0.0
        %1586 = vmatpush1.msra.mxu0 0.0
        %1587 = vmatprep.subr.mxu0 0.0
        %1588 = vmatpush1.msra.mxu0 0.0
        %1589 = vmatprep.subr.mxu0 0.0
        %1590 = vmatpush1.msra.mxu0 0.0
        %1591 = vmatprep.subr.mxu0 0.0
        %1592 = vmatpush1.msra.mxu0 0.0
        %1593 = vmatprep.subr.mxu0 0.0
        %1594 = vmatpush1.msra.mxu0 0.0
        %1595 = vmatprep.subr.mxu0 0.0
        %1596 = vmatpush1.msra.mxu0 0.0
        %1597 = vmatprep.subr.mxu0 0.0
        %1598 = vmatpush1.msra.mxu0 0.0
        %1599 = vmatprep.subr.mxu0 0.0
        %1600 = vmatpush1.msra.mxu0 0.0
        %1601 = vmatprep.subr.mxu0 0.0
        %1602 = vmatpush1.msra.mxu0 0.0
        %1603 = vmatprep.subr.mxu0 0.0
        %1604 = vmatpush1.msra.mxu0 0.0
        %1605 = vmatprep.subr.mxu0 0.0
        %1606 = vmatpush1.msra.mxu0 0.0
        %1607 = vmatprep.subr.mxu0 0.0
        %1608 = vmatpush1.msra.mxu0 0.0
        %1609 = vmatprep.subr.mxu0 0.0
        %1610 = vmatpush1.msra.mxu0 0.0
        %1611 = vmatprep.subr.mxu0 0.0
        %1612 = vmatpush1.msra.mxu0 0.0
        %1613 = vmatprep.subr.mxu0 0.0
        %1614 = vmatpush1.msra.mxu0 0.0
        %1615 = vmatprep.subr.mxu0 0.0
        %1616 = vmatpush1.msra.mxu0 0.0
        %1617 = vmatprep.subr.mxu0 0.0
        %1618 = vmatpush1.msra.mxu0 0.0
        %1619 = vmatprep.subr.mxu0 0.0
        %1620 = vmatpush1.msra.mxu0 0.0
        %1621 = vmatprep.subr.mxu0 0.0
        %1622 = vmatpush1.msra.mxu0 0.0
        %1623 = vmatprep.mubr.f32.mxu0 0.0
        %1624 = vmatmul.mubr.f32.gmra.mrb[0].mxu0 %v1557
        %v1625 = vpop.f32.mrb[0].mxu0
        %v1626 = vadd.f32 %v1554, %v1625
        %v1627 = vpop.f32.mrb[0].mxu0
        %1628 = vdwg.mxu0
        %v1629 = vmax.f32 %v1626, 0.0
        %v1630 = vld [vmem:[%s14] sm:$0xff]
        %v1631 = vld [vmem:[%s14 + $0x8] sm:$0xff]
        %v1632 = vld [vmem:[%s14 + $0x10] sm:$0xff]
        %v1633 = vld [vmem:[%s14 + $0x18] sm:$0xff]
        %v1634 = vld [vmem:[%s14 + $0x20] sm:$0xff]
        %v1635 = vld [vmem:[%s14 + $0x28] sm:$0xff]
        %v1636 = vld [vmem:[%s14 + $0x30] sm:$0xff]
        %v1637 = vld [vmem:[%s14 + $0x38] sm:$0xff]
        %v1638 = vld [vmem:[%s14 + $0x40] sm:$0xff]
        %v1639 = vld [vmem:[%s14 + $0x48] sm:$0xff]
        %v1640 = vld [vmem:[%s14 + $0x50] sm:$0xff]
        %v1641 = vld [vmem:[%s14 + $0x58] sm:$0xff]
        %v1642 = vld [vmem:[%s14 + $0x60] sm:$0xff]
        %v1643 = vld [vmem:[%s14 + $0x68] sm:$0xff]
        %v1644 = vld [vmem:[%s14 + $0x70] sm:$0xff]
        %v1645 = vld [vmem:[%s14 + $0x78] sm:$0xff]
        %v1646 = vld [vmem:[%s15] sm:$0x1]
        %v1648 = vlaneseq
        %v1649 = vshrl.u32 %v1648, 7
        %v1650 = vsub.s32 0, %v1649
        %v1651 = vrot.slane %v1646, %v1650
        %1653 = vmatprep.subr.mxu0 0.0
        %1654 = vmatpush1.msra.mxu0 %v1630
        %1655 = vmatprep.subr.mxu0 0.0
        %1656 = vmatpush1.msra.mxu0 %v1631
        %1657 = vmatprep.subr.mxu0 0.0
        %1658 = vmatpush1.msra.mxu0 %v1632
        %1659 = vmatprep.subr.mxu0 0.0
        %1660 = vmatpush1.msra.mxu0 %v1633
        %1661 = vmatprep.subr.mxu0 0.0
        %1662 = vmatpush1.msra.mxu0 %v1634
        %1663 = vmatprep.subr.mxu0 0.0
        %1664 = vmatpush1.msra.mxu0 %v1635
        %1665 = vmatprep.subr.mxu0 0.0
        %1666 = vmatpush1.msra.mxu0 %v1636
        %1667 = vmatprep.subr.mxu0 0.0
        %1668 = vmatpush1.msra.mxu0 %v1637
        %1669 = vmatprep.subr.mxu0 0.0
        %1670 = vmatpush1.msra.mxu0 %v1638
        %1671 = vmatprep.subr.mxu0 0.0
        %1672 = vmatpush1.msra.mxu0 %v1639
        %1673 = vmatprep.subr.mxu0 0.0
        %1674 = vmatpush1.msra.mxu0 %v1640
        %1675 = vmatprep.subr.mxu0 0.0
        %1676 = vmatpush1.msra.mxu0 %v1641
        %1677 = vmatprep.subr.mxu0 0.0
        %1678 = vmatpush1.msra.mxu0 %v1642
        %1679 = vmatprep.subr.mxu0 0.0
        %1680 = vmatpush1.msra.mxu0 %v1643
        %1681 = vmatprep.subr.mxu0 0.0
        %1682 = vmatpush1.msra.mxu0 %v1644
        %1683 = vmatprep.subr.mxu0 0.0
        %1684 = vmatpush1.msra.mxu0 %v1645
        %1685 = vmatprep.subr.mxu0 0.0
        %1686 = vmatpush1.msra.mxu0 0.0
        %1687 = vmatprep.subr.mxu0 0.0
        %1688 = vmatpush1.msra.mxu0 0.0
        %1689 = vmatprep.subr.mxu0 0.0
        %1690 = vmatpush1.msra.mxu0 0.0
        %1691 = vmatprep.subr.mxu0 0.0
        %1692 = vmatpush1.msra.mxu0 0.0
        %1693 = vmatprep.subr.mxu0 0.0
        %1694 = vmatpush1.msra.mxu0 0.0
        %1695 = vmatprep.subr.mxu0 0.0
        %1696 = vmatpush1.msra.mxu0 0.0
        %1697 = vmatprep.subr.mxu0 0.0
        %1698 = vmatpush1.msra.mxu0 0.0
        %1699 = vmatprep.subr.mxu0 0.0
        %1700 = vmatpush1.msra.mxu0 0.0
        %1701 = vmatprep.subr.mxu0 0.0
        %1702 = vmatpush1.msra.mxu0 0.0
        %1703 = vmatprep.subr.mxu0 0.0
        %1704 = vmatpush1.msra.mxu0 0.0
        %1705 = vmatprep.subr.mxu0 0.0
        %1706 = vmatpush1.msra.mxu0 0.0
        %1707 = vmatprep.subr.mxu0 0.0
        %1708 = vmatpush1.msra.mxu0 0.0
        %1709 = vmatprep.subr.mxu0 0.0
        %1710 = vmatpush1.msra.mxu0 0.0
        %1711 = vmatprep.subr.mxu0 0.0
        %1712 = vmatpush1.msra.mxu0 0.0
        %1713 = vmatprep.subr.mxu0 0.0
        %1714 = vmatpush1.msra.mxu0 0.0
        %1715 = vmatprep.subr.mxu0 0.0
        %1716 = vmatpush1.msra.mxu0 0.0
        %1717 = vmatprep.mubr.f32.mxu0 0.0
        %1718 = vmatmul.mubr.f32.gmra.mrb[0].mxu0 %v1629
        %v1719 = vpop.f32.mrb[0].mxu0
        %v1720 = vadd.f32 %v1651, %v1719
        %v1721 = vpop.f32.mrb[0].mxu0
        %1722 = vdwg.mxu0
        %v1723 = vadd.f32 %v1544, %v1720
        %v1724 = vld [vmem:[%s10] sm:$0x1]
        %v1725 = vld [vmem:[%s11] sm:$0x1]
        %v1726 = vsel %vm668, %v1723, 0.0
        %1727 = vadd.xlane.f32.xlu0 %v1726
        %v1728 = vpop.xlane.xlu0 %1727
        %v1729 = vmul.f32 %v1728, %v1520
        %v1730 = vsub.f32 %v1723, %v1729
        %v1731 = vmul.f32 %v1730, %v1730
        %v1732 = vsel %vm668, %v1731, 0.0
        %1733 = vadd.xlane.f32.xlu0 %v1732
        %v1734 = vpop.xlane.xlu0 %1733
        %v1735 = vmul.f32 %v1734, %v1520
        %v1736 = vadd.f32 %v1735, 1e-05
        %v1737 = vrsqrt.pop %v1736
        %v1738 = vmul.f32 %v1730, %v1737
        %v1740 = vlaneseq
        %v1741 = vshrl.u32 %v1740, 7
        %v1742 = vsub.s32 0, %v1741
        %v1743 = vrot.slane %v1724, %v1742
        %v1745 = vmul.f32 %v1738, %v1743
        %v1747 = vlaneseq
        %v1748 = vshrl.u32 %v1747, 7
        %v1749 = vsub.s32 0, %v1748
        %v1750 = vrot.slane %v1725, %v1749
        %v1752 = vadd.f32 %v1745, %v1750
        %1753 = vst.msk [vmem:[%s547] sm:$0xff] %vm668, %v1752
        %s1754 = sand.u32 %s400, 1
        %s1755 = scalar_lea.sflag [#allocation5], %s1754
        %s1756 = sand.u32 %s400, 1
        %s1757 = smul.addr %s1756, 8
        %s1758 = scalar_lea.vmem [#allocation4], %s1757
        // Predicated region
        $region89: #{tpu_custom_call.1} parent=83 // pred_check
          %p1759 = pneg %p410
        $region90: #{tpu_custom_call.1} parent=83 // pred_check_branch
          %1761 = sbr.rel (%p1759) target = $region92
        $region91: #{tpu_custom_call.1} parent=83 // pred_region
          %s1763 = ssub.s32 128, 128
          %1764 = vsyncadd %s1755, %s1763
          %s1765 = sadd.s32 %s35, %s34
          %s1766 = smul.addr %s1765, 128
          %s1767 = scalar_lea.hbm %s16, %s1766
          %s1769 = sshll.u32 %s1758, 4
          %s1770 = int_to_ptr.vmem [resolvable:$true] %s1769
          %1772 = dma.vmem_to_hbm [thread:$0]  %s1770, 128, %s1767, %s1755
        $region92: #{tpu_custom_call.1} parent=83 // pred_fallthru
          _
      $region84: #{tpu_custom_call.1} parent=5 // pred_fallthru
        _
      %p1773 = scmp.le.s32.totalorder 2, %s25
      // Predicated region
      $region93: #{tpu_custom_call.1} parent=5 // pred_check
        %p1774 = pneg %p1773
      $region94: #{tpu_custom_call.1} parent=5 // pred_check_branch
        %1776 = sbr.rel (%p1774) target = $region96
      $region95: #{tpu_custom_call.1} parent=5 // pred_region
        %s1777 = ssub.s32 %s25, 2
        // Predicated region
        $region97: #{tpu_custom_call.1} parent=95 // pred_check
          %p1778 = pneg %p416
        $region98: #{tpu_custom_call.1} parent=95 // pred_check_branch
          %1780 = sbr.rel (%p1778) target = $region100
        $region99: #{tpu_custom_call.1} parent=95 // pred_region
          %s1781 = sand.u32 %s401, 1
          %s1782 = scalar_lea.sflag [#allocation5], %s1781
          %s1783 = sand.u32 %s401, 1
          %s1784 = smul.addr %s1783, 8
          %s1785 = scalar_lea.vmem [#allocation4], %s1784
          %1786 = dma.done %s1782, 128
        $region100: #{tpu_custom_call.1} parent=95 // pred_fallthru
          _
      $region96: #{tpu_custom_call.1} parent=5 // pred_fallthru
        _
    $region6: #{tpu_custom_call.1} parent=1 // loop_footer
      %s29 = sadd.s32 1, %s25
    $region7: #{tpu_custom_call.1} parent=1 // loop_footer_branch
      %24 = sbr.rel target = $region3
    $region8: #{tpu_custom_call.1} parent=1 // loop_exit
      _
    %1787 = vsyncpa [#allocation5], 1
    %s1788 = scalar_lea.sflag [#allocation5], 1
    %1789 = vsyncpa %s1788, 1

</llo_original>
